<compile_context>
chip_gen: v7x
topology: tpu7x:2x2x1
jax: 0.10.0
libtpu: 0.0.40
codegen_flags: <defaults>
</compile_context>

<pallas_src>
import functools

import jax
import jax.numpy as jnp
from jax.experimental import pallas as pl
from jax.experimental.pallas import tpu as pltpu


def _round_up(x, m):
    return ((x + m - 1) // m) * m


def _choose_bm(batch, block_batch):
    """Pick the batch-tile (M) size.

    - multiple of 8 (sublane), capped by block_batch
    - snapped to a multiple of 256 once >= 256 (fills the v6e/v7x 2x256 MXU;
      also a multiple of 128 for v5e's 4x128 MXU)
    - for large batches, capped so the 'parallel' grid axis gets >= 2 steps
      (lets both v7x TensorCores engage)
    """
    b_round = _round_up(batch, 8)
    bm = min(block_batch, b_round)
    if bm >= 256:
        bm = (bm // 256) * 256
    if b_round // bm < 2:
        half = (b_round // 2) // 8 * 8
        if half >= 256:
            half = (half // 256) * 256
        if half >= 256:  # only split when each tile stays MXU-efficient
            bm = min(bm, half)
    return bm


def ann_kernel(x_ref, w1_ref, b1_ref, w2_ref, b2_ref, w3_ref, b3_ref, o_ref,
               *, use_bf16=False):
    cdt = jnp.bfloat16 if use_bf16 else jnp.float32
    prec = None if use_bf16 else jax.lax.Precision.HIGHEST
    # fc1 + ReLU
    h1 = jnp.dot(x_ref[...].astype(cdt), w1_ref[...].astype(cdt),
                 preferred_element_type=jnp.float32, precision=prec)
    h1 = jnp.maximum(h1 + b1_ref[...], 0.0)
    # fc2 + Tanh (tanh runs on the EUP -> free slot alongside MXU/VPU)
    h2 = jnp.dot(h1.astype(cdt), w2_ref[...].astype(cdt),
                 preferred_element_type=jnp.float32, precision=prec)
    h2 = jnp.tanh(h2 + b2_ref[...])
    # fc3 (output lane dim pre-padded to 128 -> unmasked lane-dense store)
    out = jnp.dot(h2.astype(cdt), w3_ref[...].astype(cdt),
                  preferred_element_type=jnp.float32, precision=prec)
    o_ref[...] = (out + b3_ref[...]).astype(o_ref.dtype)


def prepare_params(w1, b1, w2, b2, w3, b3):
    """One-time layout prep (NOT on the per-call path).

    Pads fc3's output (lane) dim up to a multiple of 128 so the kernel's final
    store is an unmasked, lane-dense vst.  Weights are already stored
    pre-transposed as (in_features, out_features), biases as (1, out_features).
    """
    out_size = w3.shape[1]
    n_pad = _round_up(out_size, 128)
    w3_p = jnp.pad(w3, ((0, 0), (0, n_pad - out_size)))
    b3_p = jnp.pad(b3, ((0, 0), (0, n_pad - out_size)))
    return (w1, b1, w2, b2, w3_p, b3_p), out_size


@functools.partial(
    jax.jit,
    static_argnames=("out_size", "block_batch", "strip_padding", "use_bf16"))
def ann_forward(x, params, *, out_size, block_batch=512,
                strip_padding=True, use_bf16=False):
    w1, b1, w2, b2, w3_p, b3_p = params
    batch, in_size = x.shape
    hidden = w1.shape[1]
    n_pad = w3_p.shape[1]

    bm = _choose_bm(batch, block_batch)
    b_pad = _round_up(batch, bm)
    grid = (b_pad // bm,)

    # Only pad batch rows if the tile count actually requires it.
    x_p = x if b_pad == batch else jnp.pad(x, ((0, b_pad - batch), (0, 0)))

    # VMEM guard: resident weights + double-buffered x/out tiles must fit
    # (v7x: 64 MiB physical, 32 MiB default scoped).  ~0.2 MiB at hidden=128.
    resident_bytes = 4 * (w1.size + b1.size + w2.size + b2.size
                          + w3_p.size + b3_p.size)
    stream_bytes = 2 * 4 * bm * (in_size + n_pad)  # double-buffered x + out tiles
    assert resident_bytes + stream_bytes < (24 << 20), (
        "weights too large for whole-weight VMEM residency; tile K/N instead")

    # Weights / biases: constant index_map -> stay VMEM-resident across steps.
    resident = lambda a: pl.BlockSpec(a.shape, lambda i: (0,) * a.ndim)

    cost = pl.CostEstimate(
        flops=2 * b_pad * (in_size * hidden + hidden * hidden + hidden * n_pad),
        transcendentals=b_pad * hidden,  # tanh
        bytes_accessed=4 * (x_p.size + w1.size + b1.size + w2.size + b2.size
                            + w3_p.size + b3_p.size + b_pad * n_pad),
    )

    out_padded = pl.pallas_call(
        functools.partial(ann_kernel, use_bf16=use_bf16),
        out_shape=jax.ShapeDtypeStruct((b_pad, n_pad), jnp.float32),
        grid_spec=pltpu.PrefetchScalarGridSpec(
            num_scalar_prefetch=0,
            grid=grid,
            in_specs=[
                # x tile: full-extent last dim (== in_size) is legal, no K pad.
                pl.BlockSpec((bm, in_size), lambda i: (i, 0)),
                resident(w1), resident(b1),
                resident(w2), resident(b2),
                resident(w3_p), resident(b3_p),
            ],
            out_specs=pl.BlockSpec((bm, n_pad), lambda i: (i, 0)),
        ),
        compiler_params=pltpu.CompilerParams(
            dimension_semantics=("parallel",),
        ),
        cost_estimate=cost,
    )(x_p, w1, b1, w2, b2, w3_p, b3_p)

    if not strip_padding:
        return out_padded          # (b_pad, n_pad) lane-dense layout, no copy
    if b_pad == batch:
        return out_padded[:, :out_size]        # lane-only slice
    return out_padded[:batch, :out_size]


def init_linear(key, in_features, out_features):
    """Deterministic init mimicking nn.Linear's uniform(-1/sqrt(fan_in), +)."""
    kw, kb = jax.random.split(key)
    bound = 1.0 / jnp.sqrt(jnp.float32(in_features))
    # Stored as (in_features, out_features) — already transposed vs. PyTorch.
    w = jax.random.uniform(kw, (in_features, out_features), jnp.float32,
                           minval=-bound, maxval=bound)
    # Bias kept 2D (1, out_features) for a clean TPU layout / broadcasting.
    b = jax.random.uniform(kb, (1, out_features), jnp.float32,
                           minval=-bound, maxval=bound)
    return w, b


if __name__ == "__main__":
    # ANN(input_size=32, hidden_size=128, output_size=50), batch=8
    batch, input_size, hidden_size, output_size = 8, 32, 128, 50

    key = jax.random.PRNGKey(0)
    kx, k1, k2, k3 = jax.random.split(key, 4)

    x = jax.random.normal(kx, (batch, input_size), jnp.float32)
    w1, b1 = init_linear(k1, input_size, hidden_size)
    w2, b2 = init_linear(k2, hidden_size, hidden_size)
    w3, b3 = init_linear(k3, hidden_size, output_size)

    # One-time parameter layout prep (lane-pad fc3 to 128) — off the call path.
    params, out_size = prepare_params(w1, b1, w2, b2, w3, b3)

    out = ann_forward(x, params, out_size=out_size)
    out = jax.block_until_ready(out)

    # Reference in plain JAX (same math as the PyTorch forward), matched precision.
    with jax.default_matmul_precision("highest"):
        h = jnp.maximum(x @ w1 + b1, 0.0)
        h = jnp.tanh(h @ w2 + b2)
        ref = h @ w3 + b3

    assert out.shape == (batch, output_size)
    assert jnp.allclose(out, ref, atol=1e-5, rtol=1e-5)

    print("KERNEL_OK")
</pallas_src>

<mosaic_0001>
module attributes {stable_mosaic.version = 11 : i64} {
  func.func @ann_kernel(%arg0: i32, %arg1: memref<8x32xf32, #tpu.memory_space<vmem>>, %arg2: memref<32x128xf32, #tpu.memory_space<vmem>>, %arg3: memref<1x128xf32, #tpu.memory_space<vmem>>, %arg4: memref<128x128xf32, #tpu.memory_space<vmem>>, %arg5: memref<1x128xf32, #tpu.memory_space<vmem>>, %arg6: memref<128x128xf32, #tpu.memory_space<vmem>>, %arg7: memref<1x128xf32, #tpu.memory_space<vmem>>, %arg8: memref<8x128xf32, #tpu.memory_space<vmem>>) attributes {dimension_semantics = [#tpu.dimension_semantics<parallel>], iteration_bounds = array<i64: 1>, scalar_prefetch = 0 : i64, scratch_operands = 0 : i64, tpu.core_type = #tpu.core_type<tc>, window_params = [{transform_indices = @transform_0, window_bounds = array<i64: 8, 32>}, {pipeline_mode = #tpu.pipeline_mode<synchronous>, transform_indices = @transform_1, window_bounds = array<i64: 32, 128>}, {pipeline_mode = #tpu.pipeline_mode<synchronous>, transform_indices = @transform_2, window_bounds = array<i64: 1, 128>}, {pipeline_mode = #tpu.pipeline_mode<synchronous>, transform_indices = @transform_3, window_bounds = array<i64: 128, 128>}, {pipeline_mode = #tpu.pipeline_mode<synchronous>, transform_indices = @transform_4, window_bounds = array<i64: 1, 128>}, {pipeline_mode = #tpu.pipeline_mode<synchronous>, transform_indices = @transform_5, window_bounds = array<i64: 128, 128>}, {pipeline_mode = #tpu.pipeline_mode<synchronous>, transform_indices = @transform_6, window_bounds = array<i64: 1, 128>}, {transform_indices = @transform_7, window_bounds = array<i64: 8, 128>}]} {
    %c0 = arith.constant 0 : index
    %c0_0 = arith.constant 0 : index
    %0 = vector.load %arg1[%c0, %c0_0] : memref<8x32xf32, #tpu.memory_space<vmem>>, vector<8x32xf32>
    %c0_1 = arith.constant 0 : index
    %c0_2 = arith.constant 0 : index
    %1 = vector.load %arg2[%c0_1, %c0_2] : memref<32x128xf32, #tpu.memory_space<vmem>>, vector<32x128xf32>
    %cst = arith.constant dense<0.000000e+00> : vector<8x128xf32>
    %2 = tpu.matmul %0, %1, %cst {dimension_numbers = #tpu.dot_dimension_numbers<[1], [0], [0], [1], [0, 0, 1, 1], [], []>, precision = #tpu.contract_precision<fp32>} : vector<8x32xf32>, vector<32x128xf32>, vector<8x128xf32> -> vector<8x128xf32>
    %c0_3 = arith.constant 0 : index
    %c0_4 = arith.constant 0 : index
    %3 = vector.load %arg3[%c0_3, %c0_4] : memref<1x128xf32, #tpu.memory_space<vmem>>, vector<1x128xf32>
    %4 = vector.broadcast %3 : vector<1x128xf32> to vector<8x128xf32>
    %5 = arith.addf %2, %4 : vector<8x128xf32>
    %cst_5 = arith.constant 0.000000e+00 : f32
    %6 = vector.broadcast %cst_5 : f32 to vector<8x128xf32>
    %7 = arith.maximumf %5, %6 : vector<8x128xf32>
    %c0_6 = arith.constant 0 : index
    %c0_7 = arith.constant 0 : index
    %8 = vector.load %arg4[%c0_6, %c0_7] : memref<128x128xf32, #tpu.memory_space<vmem>>, vector<128x128xf32>
    %cst_8 = arith.constant dense<0.000000e+00> : vector<8x128xf32>
    %9 = tpu.matmul %7, %8, %cst_8 {dimension_numbers = #tpu.dot_dimension_numbers<[1], [0], [0], [1], [0, 0, 1, 1], [], []>, precision = #tpu.contract_precision<fp32>} : vector<8x128xf32>, vector<128x128xf32>, vector<8x128xf32> -> vector<8x128xf32>
    %c0_9 = arith.constant 0 : index
    %c0_10 = arith.constant 0 : index
    %10 = vector.load %arg5[%c0_9, %c0_10] : memref<1x128xf32, #tpu.memory_space<vmem>>, vector<1x128xf32>
    %11 = vector.broadcast %10 : vector<1x128xf32> to vector<8x128xf32>
    %12 = arith.addf %9, %11 : vector<8x128xf32>
    %13 = math.tanh %12 : vector<8x128xf32>
    %c0_11 = arith.constant 0 : index
    %c0_12 = arith.constant 0 : index
    %14 = vector.load %arg6[%c0_11, %c0_12] : memref<128x128xf32, #tpu.memory_space<vmem>>, vector<128x128xf32>
    %cst_13 = arith.constant dense<0.000000e+00> : vector<8x128xf32>
    %15 = tpu.matmul %13, %14, %cst_13 {dimension_numbers = #tpu.dot_dimension_numbers<[1], [0], [0], [1], [0, 0, 1, 1], [], []>, precision = #tpu.contract_precision<fp32>} : vector<8x128xf32>, vector<128x128xf32>, vector<8x128xf32> -> vector<8x128xf32>
    %c0_14 = arith.constant 0 : index
    %c0_15 = arith.constant 0 : index
    %16 = vector.load %arg7[%c0_14, %c0_15] : memref<1x128xf32, #tpu.memory_space<vmem>>, vector<1x128xf32>
    %17 = vector.broadcast %16 : vector<1x128xf32> to vector<8x128xf32>
    %18 = arith.addf %15, %17 : vector<8x128xf32>
    %c0_16 = arith.constant 0 : index
    %c0_17 = arith.constant 0 : index
    %19 = vector.load %arg8[%c0_16, %c0_17] : memref<8x128xf32, #tpu.memory_space<vmem>>, vector<8x128xf32>
    tpu.vector_store %arg8[%c0_16, %c0_17], %18 {strides = array<i32>} : memref<8x128xf32, #tpu.memory_space<vmem>>, vector<8x128xf32>,
    return
  }
  func.func @transform_0(%arg0: i32) -> (i32, i32) {
    %c0_i32 = arith.constant 0 : i32
    %c0_i32_0 = arith.constant 0 : i32
    return %arg0, %c0_i32 : i32, i32
  }
  func.func @transform_1(%arg0: i32) -> (i32, i32) {
    %c0_i32 = arith.constant 0 : i32
    %c0_i32_0 = arith.constant 0 : i32
    %c0_i32_1 = arith.constant 0 : i32
    return %c0_i32, %c0_i32_0 : i32, i32
  }
  func.func @transform_2(%arg0: i32) -> (i32, i32) {
    %c0_i32 = arith.constant 0 : i32
    %c0_i32_0 = arith.constant 0 : i32
    %c0_i32_1 = arith.constant 0 : i32
    return %c0_i32, %c0_i32_0 : i32, i32
  }
  func.func @transform_3(%arg0: i32) -> (i32, i32) {
    %c0_i32 = arith.constant 0 : i32
    %c0_i32_0 = arith.constant 0 : i32
    %c0_i32_1 = arith.constant 0 : i32
    return %c0_i32, %c0_i32_0 : i32, i32
  }
  func.func @transform_4(%arg0: i32) -> (i32, i32) {
    %c0_i32 = arith.constant 0 : i32
    %c0_i32_0 = arith.constant 0 : i32
    %c0_i32_1 = arith.constant 0 : i32
    return %c0_i32, %c0_i32_0 : i32, i32
  }
  func.func @transform_5(%arg0: i32) -> (i32, i32) {
    %c0_i32 = arith.constant 0 : i32
    %c0_i32_0 = arith.constant 0 : i32
    %c0_i32_1 = arith.constant 0 : i32
    return %c0_i32, %c0_i32_0 : i32, i32
  }
  func.func @transform_6(%arg0: i32) -> (i32, i32) {
    %c0_i32 = arith.constant 0 : i32
    %c0_i32_0 = arith.constant 0 : i32
    %c0_i32_1 = arith.constant 0 : i32
    return %c0_i32, %c0_i32_0 : i32, i32
  }
  func.func @transform_7(%arg0: i32) -> (i32, i32) {
    %c0_i32 = arith.constant 0 : i32
    %c0_i32_0 = arith.constant 0 : i32
    return %arg0, %c0_i32 : i32, i32
  }
}

</mosaic_0001>

<llo_original>
// kernel: ann_forward.1
$region0: #{ann_forward.1}
  #allocation0 [shape = 'u32[]', space=smem, size = 0x4, offset = 0x4, fixed_abs, tag = 'smem constant byte address 0x4 - core index']
  #allocation1 [shape = 'u32[144,128]{1,0:T(1,128)}', space=vmem, size = 0x12000, scoped, tag = 'internal scratch']
  %s0 = inlined_call_operand.hbm [shape: f32[8,32], index: 0, kind: input, shape index: {}]
  %s1 = inlined_call_operand.hbm [shape: f32[32,128], index: 1, kind: input, shape index: {}]
  %s2 = inlined_call_operand.vmem [shape: f32[1,128], index: 2, kind: input, shape index: {}]
  %s3 = inlined_call_operand.hbm [shape: f32[128,128], index: 3, kind: input, shape index: {}]
  %s4 = inlined_call_operand.vmem [shape: f32[1,128], index: 4, kind: input, shape index: {}]
  %s5 = inlined_call_operand.hbm [shape: f32[128,128], index: 5, kind: input, shape index: {}]
  %s6 = inlined_call_operand.vmem [shape: f32[1,128], index: 6, kind: input, shape index: {}]
  %s7 = inlined_call_operand.hbm [shape: f32[8,128], index: 7, kind: output, shape index: {}]
  %s8 = sld [smem:[#allocation0]]
  $region54: #{ann_forward.1} parent=0
    _
  %s10 = ssub.s32 1, %s8
  %s11 = scalar_select 0, %s10, %s8
  $region1: #{ann_forward.1} parent=0
    #allocation2 [shape = 'u8[4096]{0}', space=vmem, size = 0x1000, scoped, tag = 'input window, operand 0, single buffered']
    #allocation3 [shape = 's32[1]{0}', space=sflag, size = 0x4, scoped, tag = 'scoped memory for ann_forward.1']
    #allocation4 [shape = 's32[1]{0}', space=sflag, size = 0x4, scoped, tag = 'scoped memory for ann_forward.1']
    #allocation5 [shape = 'u8[16384]{0}', space=vmem, size = 0x4000, scoped, tag = 'input window, operand 1, single buffered']
    #allocation6 [shape = 's32[1]{0}', space=sflag, size = 0x4, scoped, tag = 'scoped memory for ann_forward.1']
    #allocation7 [shape = 'u8[65536]{0}', space=vmem, size = 0x10000, scoped, tag = 'input window, operand 3, single buffered']
    #allocation8 [shape = 'u8[65536]{0}', space=vmem, size = 0x10000, scoped, tag = 'input window, operand 5, single buffered']
    #allocation9 [shape = 's32[1]{0}', space=sflag, size = 0x4, scoped, tag = 'scoped memory for ann_forward.1']
    #allocation10 [shape = 'u8[4096]{0}', space=vmem, size = 0x1000, scoped, tag = 'output window, operand 0, single buffered']
    %12 = vsyncpa [#allocation3], 0
    %13 = vsyncpa [#allocation6], 0
    %14 = vsyncpa [#allocation9], 0
    %15 = vsyncpa [#allocation4], 0
    // Predicated region
    $region2: #{ann_forward.1} parent=1 // pred_check
      _
    $region3: #{ann_forward.1} parent=1 // pred_check_branch
      %17 = sbr.rel (0) target = $region5
    $region4: #{ann_forward.1} parent=1 // pred_region
      %s19 = ssub.s32 128, 128
      %20 = vsyncadd [#allocation3], %s19
      %s22 = sshll.u32 [#allocation2], 4
      %s23 = int_to_ptr.vmem [resolvable:$true] %s22
      %25 = dma.hbm_to_vmem [thread:$0]  %s0, 128, %s23, [#allocation3]
    $region5: #{ann_forward.1} parent=1 // pred_fallthru
      _
    // Predicated region
    $region6: #{ann_forward.1} parent=1 // pred_check
      _
    $region7: #{ann_forward.1} parent=1 // pred_check_branch
      %27 = sbr.rel (0) target = $region9
    $region8: #{ann_forward.1} parent=1 // pred_region
      %s29 = ssub.s32 512, 512
      %30 = vsyncadd [#allocation6], %s29
      %s31 = sshll.u32 [#allocation5], 4
      %s32 = int_to_ptr.vmem [resolvable:$true] %s31
      %37 = dma.hbm_to_vmem [thread:$0]  %s1, 512, %s32, [#allocation6], 128, 128, 8
    $region9: #{ann_forward.1} parent=1 // pred_fallthru
      _
    // Predicated region
    $region10: #{ann_forward.1} parent=1 // pred_check
      _
    $region11: #{ann_forward.1} parent=1 // pred_check_branch
      %39 = sbr.rel (0) target = $region13
    $region12: #{ann_forward.1} parent=1 // pred_region
      _
    $region13: #{ann_forward.1} parent=1 // pred_fallthru
      _
    // Predicated region
    $region14: #{ann_forward.1} parent=1 // pred_check
      _
    $region15: #{ann_forward.1} parent=1 // pred_check_branch
      %41 = sbr.rel (0) target = $region17
    $region16: #{ann_forward.1} parent=1 // pred_region
      %s43 = ssub.s32 2048, 2048
      %44 = vsyncadd [#allocation6], %s43
      %s45 = sshll.u32 [#allocation7], 4
      %s46 = int_to_ptr.vmem [resolvable:$true] %s45
      %51 = dma.hbm_to_vmem [thread:$0]  %s3, 2048, %s46, [#allocation6], 128, 128, 8
    $region17: #{ann_forward.1} parent=1 // pred_fallthru
      _
    // Predicated region
    $region18: #{ann_forward.1} parent=1 // pred_check
      _
    $region19: #{ann_forward.1} parent=1 // pred_check_branch
      %53 = sbr.rel (0) target = $region21
    $region20: #{ann_forward.1} parent=1 // pred_region
      _
    $region21: #{ann_forward.1} parent=1 // pred_fallthru
      _
    // Predicated region
    $region22: #{ann_forward.1} parent=1 // pred_check
      _
    $region23: #{ann_forward.1} parent=1 // pred_check_branch
      %55 = sbr.rel (0) target = $region25
    $region24: #{ann_forward.1} parent=1 // pred_region
      %s57 = ssub.s32 2048, 2048
      %58 = vsyncadd [#allocation9], %s57
      %s59 = sshll.u32 [#allocation8], 4
      %s60 = int_to_ptr.vmem [resolvable:$true] %s59
      %65 = dma.hbm_to_vmem [thread:$0]  %s5, 2048, %s60, [#allocation9], 128, 128, 8
    $region25: #{ann_forward.1} parent=1 // pred_fallthru
      _
    // Predicated region
    $region26: #{ann_forward.1} parent=1 // pred_check
      _
    $region27: #{ann_forward.1} parent=1 // pred_check_branch
      %67 = sbr.rel (0) target = $region29
    $region28: #{ann_forward.1} parent=1 // pred_region
      _
    $region29: #{ann_forward.1} parent=1 // pred_fallthru
      _
    // Predicated region
    $region30: #{ann_forward.1} parent=1 // pred_check
      _
    $region31: #{ann_forward.1} parent=1 // pred_check_branch
      %69 = sbr.rel (0) target = $region33
    $region32: #{ann_forward.1} parent=1 // pred_region
      %70 = dma.done [#allocation3], 128
    $region33: #{ann_forward.1} parent=1 // pred_fallthru
      _
    // Predicated region
    $region34: #{ann_forward.1} parent=1 // pred_check
      _
    $region35: #{ann_forward.1} parent=1 // pred_check_branch
      %72 = sbr.rel (0) target = $region37
    $region36: #{ann_forward.1} parent=1 // pred_region
      %73 = dma.done [#allocation6], 512
    $region37: #{ann_forward.1} parent=1 // pred_fallthru
      _
    // Predicated region
    $region38: #{ann_forward.1} parent=1 // pred_check
      _
    $region39: #{ann_forward.1} parent=1 // pred_check_branch
      %75 = sbr.rel (0) target = $region41
    $region40: #{ann_forward.1} parent=1 // pred_region
      %76 = dma.done [#allocation6], 2048
    $region41: #{ann_forward.1} parent=1 // pred_fallthru
      _
    // Predicated region
    $region42: #{ann_forward.1} parent=1 // pred_check
      _
    $region43: #{ann_forward.1} parent=1 // pred_check_branch
      %78 = sbr.rel (0) target = $region45
    $region44: #{ann_forward.1} parent=1 // pred_region
      %79 = dma.done [#allocation9], 2048
    $region45: #{ann_forward.1} parent=1 // pred_fallthru
      _
    %v80 = vld [vmem:[#allocation2] sm:$0xff]
    %v81 = vld [vmem:[#allocation5] sm:$0xff]
    %v82 = vld [vmem:[#allocation5 + $0x8] sm:$0xff]
    %v83 = vld [vmem:[#allocation5 + $0x10] sm:$0xff]
    %v84 = vld [vmem:[#allocation5 + $0x18] sm:$0xff]
    %v85 = vld [vmem:[%s2] sm:$0x1]
    %v87 = vlaneseq
    %v88 = vshrl.u32 %v87, 7
    %v89 = vsub.s32 0, %v88
    %v90 = vrot.slane %v85, %v89
    %vm92 = vcmask 261120
    %v94 = vsel %vm92, %v80, 0
    %96 = vmatprep.subr.mxu0 0.0
    %v97 = vand.u32 %v81, 4294901760
    %98 = vmatpush1.msra.mxu0 %v97
    %99 = vmatprep.subr.mxu0 0.0
    %v100 = vand.u32 %v82, 4294901760
    %101 = vmatpush1.msra.mxu0 %v100
    %102 = vmatprep.subr.mxu0 0.0
    %v103 = vand.u32 %v83, 4294901760
    %104 = vmatpush1.msra.mxu0 %v103
    %105 = vmatprep.subr.mxu0 0.0
    %v106 = vand.u32 %v84, 4294901760
    %107 = vmatpush1.msra.mxu0 %v106
    %108 = vmatprep.subr.mxu0 0.0
    %109 = vmatpush1.msra.mxu0 0.0
    %110 = vmatprep.subr.mxu0 0.0
    %111 = vmatpush1.msra.mxu0 0.0
    %112 = vmatprep.subr.mxu0 0.0
    %113 = vmatpush1.msra.mxu0 0.0
    %114 = vmatprep.subr.mxu0 0.0
    %115 = vmatpush1.msra.mxu0 0.0
    %116 = vmatprep.subr.mxu0 0.0
    %117 = vmatpush1.msra.mxu0 0.0
    %118 = vmatprep.subr.mxu0 0.0
    %119 = vmatpush1.msra.mxu0 0.0
    %120 = vmatprep.subr.mxu0 0.0
    %121 = vmatpush1.msra.mxu0 0.0
    %122 = vmatprep.subr.mxu0 0.0
    %123 = vmatpush1.msra.mxu0 0.0
    %124 = vmatprep.subr.mxu0 0.0
    %125 = vmatpush1.msra.mxu0 0.0
    %126 = vmatprep.subr.mxu0 0.0
    %127 = vmatpush1.msra.mxu0 0.0
    %128 = vmatprep.subr.mxu0 0.0
    %129 = vmatpush1.msra.mxu0 0.0
    %130 = vmatprep.subr.mxu0 0.0
    %131 = vmatpush1.msra.mxu0 0.0
    %132 = vmatprep.subr.mxu0 0.0
    %133 = vmatpush1.msra.mxu0 0.0
    %134 = vmatprep.subr.mxu0 0.0
    %135 = vmatpush1.msra.mxu0 0.0
    %136 = vmatprep.subr.mxu0 0.0
    %137 = vmatpush1.msra.mxu0 0.0
    %138 = vmatprep.subr.mxu0 0.0
    %139 = vmatpush1.msra.mxu0 0.0
    %140 = vmatprep.subr.mxu0 0.0
    %141 = vmatpush1.msra.mxu0 0.0
    %142 = vmatprep.subr.mxu0 0.0
    %143 = vmatpush1.msra.mxu0 0.0
    %144 = vmatprep.subr.mxu0 0.0
    %145 = vmatpush1.msra.mxu0 0.0
    %146 = vmatprep.subr.mxu0 0.0
    %147 = vmatpush1.msra.mxu0 0.0
    %148 = vmatprep.subr.mxu0 0.0
    %149 = vmatpush1.msra.mxu0 0.0
    %150 = vmatprep.subr.mxu0 0.0
    %151 = vmatpush1.msra.mxu0 0.0
    %152 = vmatprep.subr.mxu0 0.0
    %153 = vmatpush1.msra.mxu0 0.0
    %154 = vmatprep.subr.mxu0 0.0
    %155 = vmatpush1.msra.mxu0 0.0
    %156 = vmatprep.subr.mxu0 0.0
    %157 = vmatpush1.msra.mxu0 0.0
    %158 = vmatprep.subr.mxu0 0.0
    %159 = vmatpush1.msra.mxu0 0.0
    %160 = vmatprep.subr.mxu0 0.0
    %161 = vmatpush1.msra.mxu0 0.0
    %162 = vmatprep.subr.mxu0 0.0
    %163 = vmatpush1.msra.mxu0 0.0
    %164 = vmatprep.mubr.f32.mxu0 0.0
    %v165 = vand.u32 %v94, 4294901760
    %v166 = vsub.f32 %v94, %v165
    %v167 = vand.u32 %v166, 4294901760
    %v168 = vsub.f32 %v166, %v167
    %v169 = vand.u32 %v168, 4294901760
    %170 = vmatmul.mubr.f32.gmra.mrb[0].mxu0 %v169
    %v171 = vpop.f32.mrb[0].mxu0
    %v172 = vadd.f32 %v90, %v171
    %v173 = vpop.f32.mrb[0].mxu0
    %174 = vdwg.mxu0
    %175 = vmatprep.subr.mxu0 0.0
    %v176 = vand.u32 %v81, 4294901760
    %v177 = vsub.f32 %v81, %v176
    %v178 = vand.u32 %v177, 4294901760
    %v179 = vsub.f32 %v177, %v178
    %v180 = vand.u32 %v179, 4294901760
    %181 = vmatpush1.msra.mxu0 %v180
    %182 = vmatprep.subr.mxu0 0.0
    %v183 = vand.u32 %v82, 4294901760
    %v184 = vsub.f32 %v82, %v183
    %v185 = vand.u32 %v184, 4294901760
    %v186 = vsub.f32 %v184, %v185
    %v187 = vand.u32 %v186, 4294901760
    %188 = vmatpush1.msra.mxu0 %v187
    %189 = vmatprep.subr.mxu0 0.0
    %v190 = vand.u32 %v83, 4294901760
    %v191 = vsub.f32 %v83, %v190
    %v192 = vand.u32 %v191, 4294901760
    %v193 = vsub.f32 %v191, %v192
    %v194 = vand.u32 %v193, 4294901760
    %195 = vmatpush1.msra.mxu0 %v194
    %196 = vmatprep.subr.mxu0 0.0
    %v197 = vand.u32 %v84, 4294901760
    %v198 = vsub.f32 %v84, %v197
    %v199 = vand.u32 %v198, 4294901760
    %v200 = vsub.f32 %v198, %v199
    %v201 = vand.u32 %v200, 4294901760
    %202 = vmatpush1.msra.mxu0 %v201
    %203 = vmatprep.subr.mxu0 0.0
    %204 = vmatpush1.msra.mxu0 0.0
    %205 = vmatprep.subr.mxu0 0.0
    %206 = vmatpush1.msra.mxu0 0.0
    %207 = vmatprep.subr.mxu0 0.0
    %208 = vmatpush1.msra.mxu0 0.0
    %209 = vmatprep.subr.mxu0 0.0
    %210 = vmatpush1.msra.mxu0 0.0
    %211 = vmatprep.subr.mxu0 0.0
    %212 = vmatpush1.msra.mxu0 0.0
    %213 = vmatprep.subr.mxu0 0.0
    %214 = vmatpush1.msra.mxu0 0.0
    %215 = vmatprep.subr.mxu0 0.0
    %216 = vmatpush1.msra.mxu0 0.0
    %217 = vmatprep.subr.mxu0 0.0
    %218 = vmatpush1.msra.mxu0 0.0
    %219 = vmatprep.subr.mxu0 0.0
    %220 = vmatpush1.msra.mxu0 0.0
    %221 = vmatprep.subr.mxu0 0.0
    %222 = vmatpush1.msra.mxu0 0.0
    %223 = vmatprep.subr.mxu0 0.0
    %224 = vmatpush1.msra.mxu0 0.0
    %225 = vmatprep.subr.mxu0 0.0
    %226 = vmatpush1.msra.mxu0 0.0
    %227 = vmatprep.subr.mxu0 0.0
    %228 = vmatpush1.msra.mxu0 0.0
    %229 = vmatprep.subr.mxu0 0.0
    %230 = vmatpush1.msra.mxu0 0.0
    %231 = vmatprep.subr.mxu0 0.0
    %232 = vmatpush1.msra.mxu0 0.0
    %233 = vmatprep.subr.mxu0 0.0
    %234 = vmatpush1.msra.mxu0 0.0
    %235 = vmatprep.subr.mxu0 0.0
    %236 = vmatpush1.msra.mxu0 0.0
    %237 = vmatprep.subr.mxu0 0.0
    %238 = vmatpush1.msra.mxu0 0.0
    %239 = vmatprep.subr.mxu0 0.0
    %240 = vmatpush1.msra.mxu0 0.0
    %241 = vmatprep.subr.mxu0 0.0
    %242 = vmatpush1.msra.mxu0 0.0
    %243 = vmatprep.subr.mxu0 0.0
    %244 = vmatpush1.msra.mxu0 0.0
    %245 = vmatprep.subr.mxu0 0.0
    %246 = vmatpush1.msra.mxu0 0.0
    %247 = vmatprep.subr.mxu0 0.0
    %248 = vmatpush1.msra.mxu0 0.0
    %249 = vmatprep.subr.mxu0 0.0
    %250 = vmatpush1.msra.mxu0 0.0
    %251 = vmatprep.subr.mxu0 0.0
    %252 = vmatpush1.msra.mxu0 0.0
    %253 = vmatprep.subr.mxu0 0.0
    %254 = vmatpush1.msra.mxu0 0.0
    %255 = vmatprep.subr.mxu0 0.0
    %256 = vmatpush1.msra.mxu0 0.0
    %257 = vmatprep.subr.mxu0 0.0
    %258 = vmatpush1.msra.mxu0 0.0
    %259 = vmatprep.mubr.f32.mxu0 0.0
    %v260 = vand.u32 %v94, 4294901760
    %261 = vmatmul.mubr.f32.gmra.mrb[0].mxu0 %v260
    %v262 = vpop.f32.mrb[0].mxu0
    %v263 = vadd.f32 %v172, %v262
    %v264 = vpop.f32.mrb[0].mxu0
    %265 = vdwg.mxu0
    %266 = vmatprep.subr.mxu0 0.0
    %v267 = vand.u32 %v81, 4294901760
    %v268 = vsub.f32 %v81, %v267
    %269 = vmatpush1.msra.mxu0 %v268
    %270 = vmatprep.subr.mxu0 0.0
    %v271 = vand.u32 %v82, 4294901760
    %v272 = vsub.f32 %v82, %v271
    %273 = vmatpush1.msra.mxu0 %v272
    %274 = vmatprep.subr.mxu0 0.0
    %v275 = vand.u32 %v83, 4294901760
    %v276 = vsub.f32 %v83, %v275
    %277 = vmatpush1.msra.mxu0 %v276
    %278 = vmatprep.subr.mxu0 0.0
    %v279 = vand.u32 %v84, 4294901760
    %v280 = vsub.f32 %v84, %v279
    %281 = vmatpush1.msra.mxu0 %v280
    %282 = vmatprep.subr.mxu0 0.0
    %283 = vmatpush1.msra.mxu0 0.0
    %284 = vmatprep.subr.mxu0 0.0
    %285 = vmatpush1.msra.mxu0 0.0
    %286 = vmatprep.subr.mxu0 0.0
    %287 = vmatpush1.msra.mxu0 0.0
    %288 = vmatprep.subr.mxu0 0.0
    %289 = vmatpush1.msra.mxu0 0.0
    %290 = vmatprep.subr.mxu0 0.0
    %291 = vmatpush1.msra.mxu0 0.0
    %292 = vmatprep.subr.mxu0 0.0
    %293 = vmatpush1.msra.mxu0 0.0
    %294 = vmatprep.subr.mxu0 0.0
    %295 = vmatpush1.msra.mxu0 0.0
    %296 = vmatprep.subr.mxu0 0.0
    %297 = vmatpush1.msra.mxu0 0.0
    %298 = vmatprep.subr.mxu0 0.0
    %299 = vmatpush1.msra.mxu0 0.0
    %300 = vmatprep.subr.mxu0 0.0
    %301 = vmatpush1.msra.mxu0 0.0
    %302 = vmatprep.subr.mxu0 0.0
    %303 = vmatpush1.msra.mxu0 0.0
    %304 = vmatprep.subr.mxu0 0.0
    %305 = vmatpush1.msra.mxu0 0.0
    %306 = vmatprep.subr.mxu0 0.0
    %307 = vmatpush1.msra.mxu0 0.0
    %308 = vmatprep.subr.mxu0 0.0
    %309 = vmatpush1.msra.mxu0 0.0
    %310 = vmatprep.subr.mxu0 0.0
    %311 = vmatpush1.msra.mxu0 0.0
    %312 = vmatprep.subr.mxu0 0.0
    %313 = vmatpush1.msra.mxu0 0.0
    %314 = vmatprep.subr.mxu0 0.0
    %315 = vmatpush1.msra.mxu0 0.0
    %316 = vmatprep.subr.mxu0 0.0
    %317 = vmatpush1.msra.mxu0 0.0
    %318 = vmatprep.subr.mxu0 0.0
    %319 = vmatpush1.msra.mxu0 0.0
    %320 = vmatprep.subr.mxu0 0.0
    %321 = vmatpush1.msra.mxu0 0.0
    %322 = vmatprep.subr.mxu0 0.0
    %323 = vmatpush1.msra.mxu0 0.0
    %324 = vmatprep.subr.mxu0 0.0
    %325 = vmatpush1.msra.mxu0 0.0
    %326 = vmatprep.subr.mxu0 0.0
    %327 = vmatpush1.msra.mxu0 0.0
    %328 = vmatprep.subr.mxu0 0.0
    %329 = vmatpush1.msra.mxu0 0.0
    %330 = vmatprep.subr.mxu0 0.0
    %331 = vmatpush1.msra.mxu0 0.0
    %332 = vmatprep.subr.mxu0 0.0
    %333 = vmatpush1.msra.mxu0 0.0
    %334 = vmatprep.subr.mxu0 0.0
    %335 = vmatpush1.msra.mxu0 0.0
    %336 = vmatprep.subr.mxu0 0.0
    %337 = vmatpush1.msra.mxu0 0.0
    %338 = vmatprep.mubr.f32.mxu0 0.0
    %v339 = vand.u32 %v94, 4294901760
    %v340 = vsub.f32 %v94, %v339
    %341 = vmatmul.mubr.f32.gmra.mrb[0].mxu0 %v340
    %v342 = vpop.f32.mrb[0].mxu0
    %v343 = vadd.f32 %v263, %v342
    %v344 = vpop.f32.mrb[0].mxu0
    %345 = vdwg.mxu0
    %346 = vmatprep.subr.mxu0 0.0
    %v347 = vand.u32 %v81, 4294901760
    %348 = vmatpush1.msra.mxu0 %v347
    %349 = vmatprep.subr.mxu0 0.0
    %v350 = vand.u32 %v82, 4294901760
    %351 = vmatpush1.msra.mxu0 %v350
    %352 = vmatprep.subr.mxu0 0.0
    %v353 = vand.u32 %v83, 4294901760
    %354 = vmatpush1.msra.mxu0 %v353
    %355 = vmatprep.subr.mxu0 0.0
    %v356 = vand.u32 %v84, 4294901760
    %357 = vmatpush1.msra.mxu0 %v356
    %358 = vmatprep.subr.mxu0 0.0
    %359 = vmatpush1.msra.mxu0 0.0
    %360 = vmatprep.subr.mxu0 0.0
    %361 = vmatpush1.msra.mxu0 0.0
    %362 = vmatprep.subr.mxu0 0.0
    %363 = vmatpush1.msra.mxu0 0.0
    %364 = vmatprep.subr.mxu0 0.0
    %365 = vmatpush1.msra.mxu0 0.0
    %366 = vmatprep.subr.mxu0 0.0
    %367 = vmatpush1.msra.mxu0 0.0
    %368 = vmatprep.subr.mxu0 0.0
    %369 = vmatpush1.msra.mxu0 0.0
    %370 = vmatprep.subr.mxu0 0.0
    %371 = vmatpush1.msra.mxu0 0.0
    %372 = vmatprep.subr.mxu0 0.0
    %373 = vmatpush1.msra.mxu0 0.0
    %374 = vmatprep.subr.mxu0 0.0
    %375 = vmatpush1.msra.mxu0 0.0
    %376 = vmatprep.subr.mxu0 0.0
    %377 = vmatpush1.msra.mxu0 0.0
    %378 = vmatprep.subr.mxu0 0.0
    %379 = vmatpush1.msra.mxu0 0.0
    %380 = vmatprep.subr.mxu0 0.0
    %381 = vmatpush1.msra.mxu0 0.0
    %382 = vmatprep.subr.mxu0 0.0
    %383 = vmatpush1.msra.mxu0 0.0
    %384 = vmatprep.subr.mxu0 0.0
    %385 = vmatpush1.msra.mxu0 0.0
    %386 = vmatprep.subr.mxu0 0.0
    %387 = vmatpush1.msra.mxu0 0.0
    %388 = vmatprep.subr.mxu0 0.0
    %389 = vmatpush1.msra.mxu0 0.0
    %390 = vmatprep.subr.mxu0 0.0
    %391 = vmatpush1.msra.mxu0 0.0
    %392 = vmatprep.subr.mxu0 0.0
    %393 = vmatpush1.msra.mxu0 0.0
    %394 = vmatprep.subr.mxu0 0.0
    %395 = vmatpush1.msra.mxu0 0.0
    %396 = vmatprep.subr.mxu0 0.0
    %397 = vmatpush1.msra.mxu0 0.0
    %398 = vmatprep.subr.mxu0 0.0
    %399 = vmatpush1.msra.mxu0 0.0
    %400 = vmatprep.subr.mxu0 0.0
    %401 = vmatpush1.msra.mxu0 0.0
    %402 = vmatprep.subr.mxu0 0.0
    %403 = vmatpush1.msra.mxu0 0.0
    %404 = vmatprep.subr.mxu0 0.0
    %405 = vmatpush1.msra.mxu0 0.0
    %406 = vmatprep.subr.mxu0 0.0
    %407 = vmatpush1.msra.mxu0 0.0
    %408 = vmatprep.subr.mxu0 0.0
    %409 = vmatpush1.msra.mxu0 0.0
    %410 = vmatprep.subr.mxu0 0.0
    %411 = vmatpush1.msra.mxu0 0.0
    %412 = vmatprep.subr.mxu0 0.0
    %413 = vmatpush1.msra.mxu0 0.0
    %414 = vmatprep.mubr.f32.mxu0 0.0
    %v415 = vand.u32 %v94, 4294901760
    %v416 = vsub.f32 %v94, %v415
    %v417 = vand.u32 %v416, 4294901760
    %418 = vmatmul.mubr.f32.gmra.mrb[0].mxu0 %v417
    %v419 = vpop.f32.mrb[0].mxu0
    %v420 = vadd.f32 %v343, %v419
    %v421 = vpop.f32.mrb[0].mxu0
    %422 = vdwg.mxu0
    %423 = vmatprep.subr.mxu0 0.0
    %v424 = vand.u32 %v81, 4294901760
    %v425 = vsub.f32 %v81, %v424
    %v426 = vand.u32 %v425, 4294901760
    %427 = vmatpush1.msra.mxu0 %v426
    %428 = vmatprep.subr.mxu0 0.0
    %v429 = vand.u32 %v82, 4294901760
    %v430 = vsub.f32 %v82, %v429
    %v431 = vand.u32 %v430, 4294901760
    %432 = vmatpush1.msra.mxu0 %v431
    %433 = vmatprep.subr.mxu0 0.0
    %v434 = vand.u32 %v83, 4294901760
    %v435 = vsub.f32 %v83, %v434
    %v436 = vand.u32 %v435, 4294901760
    %437 = vmatpush1.msra.mxu0 %v436
    %438 = vmatprep.subr.mxu0 0.0
    %v439 = vand.u32 %v84, 4294901760
    %v440 = vsub.f32 %v84, %v439
    %v441 = vand.u32 %v440, 4294901760
    %442 = vmatpush1.msra.mxu0 %v441
    %443 = vmatprep.subr.mxu0 0.0
    %444 = vmatpush1.msra.mxu0 0.0
    %445 = vmatprep.subr.mxu0 0.0
    %446 = vmatpush1.msra.mxu0 0.0
    %447 = vmatprep.subr.mxu0 0.0
    %448 = vmatpush1.msra.mxu0 0.0
    %449 = vmatprep.subr.mxu0 0.0
    %450 = vmatpush1.msra.mxu0 0.0
    %451 = vmatprep.subr.mxu0 0.0
    %452 = vmatpush1.msra.mxu0 0.0
    %453 = vmatprep.subr.mxu0 0.0
    %454 = vmatpush1.msra.mxu0 0.0
    %455 = vmatprep.subr.mxu0 0.0
    %456 = vmatpush1.msra.mxu0 0.0
    %457 = vmatprep.subr.mxu0 0.0
    %458 = vmatpush1.msra.mxu0 0.0
    %459 = vmatprep.subr.mxu0 0.0
    %460 = vmatpush1.msra.mxu0 0.0
    %461 = vmatprep.subr.mxu0 0.0
    %462 = vmatpush1.msra.mxu0 0.0
    %463 = vmatprep.subr.mxu0 0.0
    %464 = vmatpush1.msra.mxu0 0.0
    %465 = vmatprep.subr.mxu0 0.0
    %466 = vmatpush1.msra.mxu0 0.0
    %467 = vmatprep.subr.mxu0 0.0
    %468 = vmatpush1.msra.mxu0 0.0
    %469 = vmatprep.subr.mxu0 0.0
    %470 = vmatpush1.msra.mxu0 0.0
    %471 = vmatprep.subr.mxu0 0.0
    %472 = vmatpush1.msra.mxu0 0.0
    %473 = vmatprep.subr.mxu0 0.0
    %474 = vmatpush1.msra.mxu0 0.0
    %475 = vmatprep.subr.mxu0 0.0
    %476 = vmatpush1.msra.mxu0 0.0
    %477 = vmatprep.subr.mxu0 0.0
    %478 = vmatpush1.msra.mxu0 0.0
    %479 = vmatprep.subr.mxu0 0.0
    %480 = vmatpush1.msra.mxu0 0.0
    %481 = vmatprep.subr.mxu0 0.0
    %482 = vmatpush1.msra.mxu0 0.0
    %483 = vmatprep.subr.mxu0 0.0
    %484 = vmatpush1.msra.mxu0 0.0
    %485 = vmatprep.subr.mxu0 0.0
    %486 = vmatpush1.msra.mxu0 0.0
    %487 = vmatprep.subr.mxu0 0.0
    %488 = vmatpush1.msra.mxu0 0.0
    %489 = vmatprep.subr.mxu0 0.0
    %490 = vmatpush1.msra.mxu0 0.0
    %491 = vmatprep.subr.mxu0 0.0
    %492 = vmatpush1.msra.mxu0 0.0
    %493 = vmatprep.subr.mxu0 0.0
    %494 = vmatpush1.msra.mxu0 0.0
    %495 = vmatprep.subr.mxu0 0.0
    %496 = vmatpush1.msra.mxu0 0.0
    %497 = vmatprep.subr.mxu0 0.0
    %498 = vmatpush1.msra.mxu0 0.0
    %499 = vmatprep.mubr.f32.mxu0 0.0
    %v500 = vand.u32 %v94, 4294901760
    %501 = vmatmul.mubr.f32.gmra.mrb[0].mxu0 %v500
    %v502 = vpop.f32.mrb[0].mxu0
    %v503 = vadd.f32 %v420, %v502
    %v504 = vpop.f32.mrb[0].mxu0
    %505 = vdwg.mxu0
    %506 = vmatprep.subr.mxu0 0.0
    %v507 = vand.u32 %v81, 4294901760
    %508 = vmatpush1.msra.mxu0 %v507
    %509 = vmatprep.subr.mxu0 0.0
    %v510 = vand.u32 %v82, 4294901760
    %511 = vmatpush1.msra.mxu0 %v510
    %512 = vmatprep.subr.mxu0 0.0
    %v513 = vand.u32 %v83, 4294901760
    %514 = vmatpush1.msra.mxu0 %v513
    %515 = vmatprep.subr.mxu0 0.0
    %v516 = vand.u32 %v84, 4294901760
    %517 = vmatpush1.msra.mxu0 %v516
    %518 = vmatprep.subr.mxu0 0.0
    %519 = vmatpush1.msra.mxu0 0.0
    %520 = vmatprep.subr.mxu0 0.0
    %521 = vmatpush1.msra.mxu0 0.0
    %522 = vmatprep.subr.mxu0 0.0
    %523 = vmatpush1.msra.mxu0 0.0
    %524 = vmatprep.subr.mxu0 0.0
    %525 = vmatpush1.msra.mxu0 0.0
    %526 = vmatprep.subr.mxu0 0.0
    %527 = vmatpush1.msra.mxu0 0.0
    %528 = vmatprep.subr.mxu0 0.0
    %529 = vmatpush1.msra.mxu0 0.0
    %530 = vmatprep.subr.mxu0 0.0
    %531 = vmatpush1.msra.mxu0 0.0
    %532 = vmatprep.subr.mxu0 0.0
    %533 = vmatpush1.msra.mxu0 0.0
    %534 = vmatprep.subr.mxu0 0.0
    %535 = vmatpush1.msra.mxu0 0.0
    %536 = vmatprep.subr.mxu0 0.0
    %537 = vmatpush1.msra.mxu0 0.0
    %538 = vmatprep.subr.mxu0 0.0
    %539 = vmatpush1.msra.mxu0 0.0
    %540 = vmatprep.subr.mxu0 0.0
    %541 = vmatpush1.msra.mxu0 0.0
    %542 = vmatprep.subr.mxu0 0.0
    %543 = vmatpush1.msra.mxu0 0.0
    %544 = vmatprep.subr.mxu0 0.0
    %545 = vmatpush1.msra.mxu0 0.0
    %546 = vmatprep.subr.mxu0 0.0
    %547 = vmatpush1.msra.mxu0 0.0
    %548 = vmatprep.subr.mxu0 0.0
    %549 = vmatpush1.msra.mxu0 0.0
    %550 = vmatprep.subr.mxu0 0.0
    %551 = vmatpush1.msra.mxu0 0.0
    %552 = vmatprep.subr.mxu0 0.0
    %553 = vmatpush1.msra.mxu0 0.0
    %554 = vmatprep.subr.mxu0 0.0
    %555 = vmatpush1.msra.mxu0 0.0
    %556 = vmatprep.subr.mxu0 0.0
    %557 = vmatpush1.msra.mxu0 0.0
    %558 = vmatprep.subr.mxu0 0.0
    %559 = vmatpush1.msra.mxu0 0.0
    %560 = vmatprep.subr.mxu0 0.0
    %561 = vmatpush1.msra.mxu0 0.0
    %562 = vmatprep.subr.mxu0 0.0
    %563 = vmatpush1.msra.mxu0 0.0
    %564 = vmatprep.subr.mxu0 0.0
    %565 = vmatpush1.msra.mxu0 0.0
    %566 = vmatprep.subr.mxu0 0.0
    %567 = vmatpush1.msra.mxu0 0.0
    %568 = vmatprep.subr.mxu0 0.0
    %569 = vmatpush1.msra.mxu0 0.0
    %570 = vmatprep.subr.mxu0 0.0
    %571 = vmatpush1.msra.mxu0 0.0
    %572 = vmatprep.subr.mxu0 0.0
    %573 = vmatpush1.msra.mxu0 0.0
    %574 = vmatprep.mubr.f32.mxu0 0.0
    %v575 = vand.u32 %v94, 4294901760
    %576 = vmatmul.mubr.f32.gmra.mrb[0].mxu0 %v575
    %v577 = vpop.f32.mrb[0].mxu0
    %v578 = vadd.f32 %v503, %v577
    %v579 = vpop.f32.mrb[0].mxu0
    %580 = vdwg.mxu0
    %v581 = vmax.f32 %v578, 0.0
    %v582 = vld [vmem:[#allocation7] sm:$0xff]
    %v583 = vld [vmem:[#allocation7 + $0x8] sm:$0xff]
    %v584 = vld [vmem:[#allocation7 + $0x10] sm:$0xff]
    %v585 = vld [vmem:[#allocation7 + $0x18] sm:$0xff]
    %v586 = vld [vmem:[#allocation7 + $0x20] sm:$0xff]
    %v587 = vld [vmem:[#allocation7 + $0x28] sm:$0xff]
    %v588 = vld [vmem:[#allocation7 + $0x30] sm:$0xff]
    %v589 = vld [vmem:[#allocation7 + $0x38] sm:$0xff]
    %v590 = vld [vmem:[#allocation7 + $0x40] sm:$0xff]
    %v591 = vld [vmem:[#allocation7 + $0x48] sm:$0xff]
    %v592 = vld [vmem:[#allocation7 + $0x50] sm:$0xff]
    %v593 = vld [vmem:[#allocation7 + $0x58] sm:$0xff]
    %v594 = vld [vmem:[#allocation7 + $0x60] sm:$0xff]
    %v595 = vld [vmem:[#allocation7 + $0x68] sm:$0xff]
    %v596 = vld [vmem:[#allocation7 + $0x70] sm:$0xff]
    %v597 = vld [vmem:[#allocation7 + $0x78] sm:$0xff]
    %v598 = vld [vmem:[%s4] sm:$0x1]
    %v600 = vlaneseq
    %v601 = vshrl.u32 %v600, 7
    %v602 = vsub.s32 0, %v601
    %v603 = vrot.slane %v598, %v602
    %605 = vmatprep.subr.mxu0 0.0
    %v606 = vand.u32 %v582, 4294901760
    %607 = vmatpush1.msra.mxu0 %v606
    %608 = vmatprep.subr.mxu0 0.0
    %v609 = vand.u32 %v583, 4294901760
    %610 = vmatpush1.msra.mxu0 %v609
    %611 = vmatprep.subr.mxu0 0.0
    %v612 = vand.u32 %v584, 4294901760
    %613 = vmatpush1.msra.mxu0 %v612
    %614 = vmatprep.subr.mxu0 0.0
    %v615 = vand.u32 %v585, 4294901760
    %616 = vmatpush1.msra.mxu0 %v615
    %617 = vmatprep.subr.mxu0 0.0
    %v618 = vand.u32 %v586, 4294901760
    %619 = vmatpush1.msra.mxu0 %v618
    %620 = vmatprep.subr.mxu0 0.0
    %v621 = vand.u32 %v587, 4294901760
    %622 = vmatpush1.msra.mxu0 %v621
    %623 = vmatprep.subr.mxu0 0.0
    %v624 = vand.u32 %v588, 4294901760
    %625 = vmatpush1.msra.mxu0 %v624
    %626 = vmatprep.subr.mxu0 0.0
    %v627 = vand.u32 %v589, 4294901760
    %628 = vmatpush1.msra.mxu0 %v627
    %629 = vmatprep.subr.mxu0 0.0
    %v630 = vand.u32 %v590, 4294901760
    %631 = vmatpush1.msra.mxu0 %v630
    %632 = vmatprep.subr.mxu0 0.0
    %v633 = vand.u32 %v591, 4294901760
    %634 = vmatpush1.msra.mxu0 %v633
    %635 = vmatprep.subr.mxu0 0.0
    %v636 = vand.u32 %v592, 4294901760
    %637 = vmatpush1.msra.mxu0 %v636
    %638 = vmatprep.subr.mxu0 0.0
    %v639 = vand.u32 %v593, 4294901760
    %640 = vmatpush1.msra.mxu0 %v639
    %641 = vmatprep.subr.mxu0 0.0
    %v642 = vand.u32 %v594, 4294901760
    %643 = vmatpush1.msra.mxu0 %v642
    %644 = vmatprep.subr.mxu0 0.0
    %v645 = vand.u32 %v595, 4294901760
    %646 = vmatpush1.msra.mxu0 %v645
    %647 = vmatprep.subr.mxu0 0.0
    %v648 = vand.u32 %v596, 4294901760
    %649 = vmatpush1.msra.mxu0 %v648
    %650 = vmatprep.subr.mxu0 0.0
    %v651 = vand.u32 %v597, 4294901760
    %652 = vmatpush1.msra.mxu0 %v651
    %653 = vmatprep.subr.mxu0 0.0
    %654 = vmatpush1.msra.mxu0 0.0
    %655 = vmatprep.subr.mxu0 0.0
    %656 = vmatpush1.msra.mxu0 0.0
    %657 = vmatprep.subr.mxu0 0.0
    %658 = vmatpush1.msra.mxu0 0.0
    %659 = vmatprep.subr.mxu0 0.0
    %660 = vmatpush1.msra.mxu0 0.0
    %661 = vmatprep.subr.mxu0 0.0
    %662 = vmatpush1.msra.mxu0 0.0
    %663 = vmatprep.subr.mxu0 0.0
    %664 = vmatpush1.msra.mxu0 0.0
    %665 = vmatprep.subr.mxu0 0.0
    %666 = vmatpush1.msra.mxu0 0.0
    %667 = vmatprep.subr.mxu0 0.0
    %668 = vmatpush1.msra.mxu0 0.0
    %669 = vmatprep.subr.mxu0 0.0
    %670 = vmatpush1.msra.mxu0 0.0
    %671 = vmatprep.subr.mxu0 0.0
    %672 = vmatpush1.msra.mxu0 0.0
    %673 = vmatprep.subr.mxu0 0.0
    %674 = vmatpush1.msra.mxu0 0.0
    %675 = vmatprep.subr.mxu0 0.0
    %676 = vmatpush1.msra.mxu0 0.0
    %677 = vmatprep.subr.mxu0 0.0
    %678 = vmatpush1.msra.mxu0 0.0
    %679 = vmatprep.subr.mxu0 0.0
    %680 = vmatpush1.msra.mxu0 0.0
    %681 = vmatprep.subr.mxu0 0.0
    %682 = vmatpush1.msra.mxu0 0.0
    %683 = vmatprep.subr.mxu0 0.0
    %684 = vmatpush1.msra.mxu0 0.0
    %685 = vmatprep.mubr.f32.mxu0 0.0
    %v686 = vand.u32 %v581, 4294901760
    %v687 = vsub.f32 %v581, %v686
    %v688 = vand.u32 %v687, 4294901760
    %v689 = vsub.f32 %v687, %v688
    %v690 = vand.u32 %v689, 4294901760
    %691 = vmatmul.mubr.f32.gmra.mrb[0].mxu0 %v690
    %v692 = vpop.f32.mrb[0].mxu0
    %v693 = vadd.f32 %v603, %v692
    %v694 = vpop.f32.mrb[0].mxu0
    %695 = vdwg.mxu0
    %696 = vmatprep.subr.mxu0 0.0
    %v697 = vand.u32 %v582, 4294901760
    %v698 = vsub.f32 %v582, %v697
    %v699 = vand.u32 %v698, 4294901760
    %v700 = vsub.f32 %v698, %v699
    %v701 = vand.u32 %v700, 4294901760
    %702 = vmatpush1.msra.mxu0 %v701
    %703 = vmatprep.subr.mxu0 0.0
    %v704 = vand.u32 %v583, 4294901760
    %v705 = vsub.f32 %v583, %v704
    %v706 = vand.u32 %v705, 4294901760
    %v707 = vsub.f32 %v705, %v706
    %v708 = vand.u32 %v707, 4294901760
    %709 = vmatpush1.msra.mxu0 %v708
    %710 = vmatprep.subr.mxu0 0.0
    %v711 = vand.u32 %v584, 4294901760
    %v712 = vsub.f32 %v584, %v711
    %v713 = vand.u32 %v712, 4294901760
    %v714 = vsub.f32 %v712, %v713
    %v715 = vand.u32 %v714, 4294901760
    %716 = vmatpush1.msra.mxu0 %v715
    %717 = vmatprep.subr.mxu0 0.0
    %v718 = vand.u32 %v585, 4294901760
    %v719 = vsub.f32 %v585, %v718
    %v720 = vand.u32 %v719, 4294901760
    %v721 = vsub.f32 %v719, %v720
    %v722 = vand.u32 %v721, 4294901760
    %723 = vmatpush1.msra.mxu0 %v722
    %724 = vmatprep.subr.mxu0 0.0
    %v725 = vand.u32 %v586, 4294901760
    %v726 = vsub.f32 %v586, %v725
    %v727 = vand.u32 %v726, 4294901760
    %v728 = vsub.f32 %v726, %v727
    %v729 = vand.u32 %v728, 4294901760
    %730 = vmatpush1.msra.mxu0 %v729
    %731 = vmatprep.subr.mxu0 0.0
    %v732 = vand.u32 %v587, 4294901760
    %v733 = vsub.f32 %v587, %v732
    %v734 = vand.u32 %v733, 4294901760
    %v735 = vsub.f32 %v733, %v734
    %v736 = vand.u32 %v735, 4294901760
    %737 = vmatpush1.msra.mxu0 %v736
    %738 = vmatprep.subr.mxu0 0.0
    %v739 = vand.u32 %v588, 4294901760
    %v740 = vsub.f32 %v588, %v739
    %v741 = vand.u32 %v740, 4294901760
    %v742 = vsub.f32 %v740, %v741
    %v743 = vand.u32 %v742, 4294901760
    %744 = vmatpush1.msra.mxu0 %v743
    %745 = vmatprep.subr.mxu0 0.0
    %v746 = vand.u32 %v589, 4294901760
    %v747 = vsub.f32 %v589, %v746
    %v748 = vand.u32 %v747, 4294901760
    %v749 = vsub.f32 %v747, %v748
    %v750 = vand.u32 %v749, 4294901760
    %751 = vmatpush1.msra.mxu0 %v750
    %752 = vmatprep.subr.mxu0 0.0
    %v753 = vand.u32 %v590, 4294901760
    %v754 = vsub.f32 %v590, %v753
    %v755 = vand.u32 %v754, 4294901760
    %v756 = vsub.f32 %v754, %v755
    %v757 = vand.u32 %v756, 4294901760
    %758 = vmatpush1.msra.mxu0 %v757
    %759 = vmatprep.subr.mxu0 0.0
    %v760 = vand.u32 %v591, 4294901760
    %v761 = vsub.f32 %v591, %v760
    %v762 = vand.u32 %v761, 4294901760
    %v763 = vsub.f32 %v761, %v762
    %v764 = vand.u32 %v763, 4294901760
    %765 = vmatpush1.msra.mxu0 %v764
    %766 = vmatprep.subr.mxu0 0.0
    %v767 = vand.u32 %v592, 4294901760
    %v768 = vsub.f32 %v592, %v767
    %v769 = vand.u32 %v768, 4294901760
    %v770 = vsub.f32 %v768, %v769
    %v771 = vand.u32 %v770, 4294901760
    %772 = vmatpush1.msra.mxu0 %v771
    %773 = vmatprep.subr.mxu0 0.0
    %v774 = vand.u32 %v593, 4294901760
    %v775 = vsub.f32 %v593, %v774
    %v776 = vand.u32 %v775, 4294901760
    %v777 = vsub.f32 %v775, %v776
    %v778 = vand.u32 %v777, 4294901760
    %779 = vmatpush1.msra.mxu0 %v778
    %780 = vmatprep.subr.mxu0 0.0
    %v781 = vand.u32 %v594, 4294901760
    %v782 = vsub.f32 %v594, %v781
    %v783 = vand.u32 %v782, 4294901760
    %v784 = vsub.f32 %v782, %v783
    %v785 = vand.u32 %v784, 4294901760
    %786 = vmatpush1.msra.mxu0 %v785
    %787 = vmatprep.subr.mxu0 0.0
    %v788 = vand.u32 %v595, 4294901760
    %v789 = vsub.f32 %v595, %v788
    %v790 = vand.u32 %v789, 4294901760
    %v791 = vsub.f32 %v789, %v790
    %v792 = vand.u32 %v791, 4294901760
    %793 = vmatpush1.msra.mxu0 %v792
    %794 = vmatprep.subr.mxu0 0.0
    %v795 = vand.u32 %v596, 4294901760
    %v796 = vsub.f32 %v596, %v795
    %v797 = vand.u32 %v796, 4294901760
    %v798 = vsub.f32 %v796, %v797
    %v799 = vand.u32 %v798, 4294901760
    %800 = vmatpush1.msra.mxu0 %v799
    %801 = vmatprep.subr.mxu0 0.0
    %v802 = vand.u32 %v597, 4294901760
    %v803 = vsub.f32 %v597, %v802
    %v804 = vand.u32 %v803, 4294901760
    %v805 = vsub.f32 %v803, %v804
    %v806 = vand.u32 %v805, 4294901760
    %807 = vmatpush1.msra.mxu0 %v806
    %808 = vmatprep.subr.mxu0 0.0
    %809 = vmatpush1.msra.mxu0 0.0
    %810 = vmatprep.subr.mxu0 0.0
    %811 = vmatpush1.msra.mxu0 0.0
    %812 = vmatprep.subr.mxu0 0.0
    %813 = vmatpush1.msra.mxu0 0.0
    %814 = vmatprep.subr.mxu0 0.0
    %815 = vmatpush1.msra.mxu0 0.0
    %816 = vmatprep.subr.mxu0 0.0
    %817 = vmatpush1.msra.mxu0 0.0
    %818 = vmatprep.subr.mxu0 0.0
    %819 = vmatpush1.msra.mxu0 0.0
    %820 = vmatprep.subr.mxu0 0.0
    %821 = vmatpush1.msra.mxu0 0.0
    %822 = vmatprep.subr.mxu0 0.0
    %823 = vmatpush1.msra.mxu0 0.0
    %824 = vmatprep.subr.mxu0 0.0
    %825 = vmatpush1.msra.mxu0 0.0
    %826 = vmatprep.subr.mxu0 0.0
    %827 = vmatpush1.msra.mxu0 0.0
    %828 = vmatprep.subr.mxu0 0.0
    %829 = vmatpush1.msra.mxu0 0.0
    %830 = vmatprep.subr.mxu0 0.0
    %831 = vmatpush1.msra.mxu0 0.0
    %832 = vmatprep.subr.mxu0 0.0
    %833 = vmatpush1.msra.mxu0 0.0
    %834 = vmatprep.subr.mxu0 0.0
    %835 = vmatpush1.msra.mxu0 0.0
    %836 = vmatprep.subr.mxu0 0.0
    %837 = vmatpush1.msra.mxu0 0.0
    %838 = vmatprep.subr.mxu0 0.0
    %839 = vmatpush1.msra.mxu0 0.0
    %840 = vmatprep.mubr.f32.mxu0 0.0
    %v841 = vand.u32 %v581, 4294901760
    %842 = vmatmul.mubr.f32.gmra.mrb[0].mxu0 %v841
    %v843 = vpop.f32.mrb[0].mxu0
    %v844 = vadd.f32 %v693, %v843
    %v845 = vpop.f32.mrb[0].mxu0
    %846 = vdwg.mxu0
    %847 = vmatprep.subr.mxu0 0.0
    %v848 = vand.u32 %v582, 4294901760
    %v849 = vsub.f32 %v582, %v848
    %850 = vmatpush1.msra.mxu0 %v849
    %851 = vmatprep.subr.mxu0 0.0
    %v852 = vand.u32 %v583, 4294901760
    %v853 = vsub.f32 %v583, %v852
    %854 = vmatpush1.msra.mxu0 %v853
    %855 = vmatprep.subr.mxu0 0.0
    %v856 = vand.u32 %v584, 4294901760
    %v857 = vsub.f32 %v584, %v856
    %858 = vmatpush1.msra.mxu0 %v857
    %859 = vmatprep.subr.mxu0 0.0
    %v860 = vand.u32 %v585, 4294901760
    %v861 = vsub.f32 %v585, %v860
    %862 = vmatpush1.msra.mxu0 %v861
    %863 = vmatprep.subr.mxu0 0.0
    %v864 = vand.u32 %v586, 4294901760
    %v865 = vsub.f32 %v586, %v864
    %866 = vmatpush1.msra.mxu0 %v865
    %867 = vmatprep.subr.mxu0 0.0
    %v868 = vand.u32 %v587, 4294901760
    %v869 = vsub.f32 %v587, %v868
    %870 = vmatpush1.msra.mxu0 %v869
    %871 = vmatprep.subr.mxu0 0.0
    %v872 = vand.u32 %v588, 4294901760
    %v873 = vsub.f32 %v588, %v872
    %874 = vmatpush1.msra.mxu0 %v873
    %875 = vmatprep.subr.mxu0 0.0
    %v876 = vand.u32 %v589, 4294901760
    %v877 = vsub.f32 %v589, %v876
    %878 = vmatpush1.msra.mxu0 %v877
    %879 = vmatprep.subr.mxu0 0.0
    %v880 = vand.u32 %v590, 4294901760
    %v881 = vsub.f32 %v590, %v880
    %882 = vmatpush1.msra.mxu0 %v881
    %883 = vmatprep.subr.mxu0 0.0
    %v884 = vand.u32 %v591, 4294901760
    %v885 = vsub.f32 %v591, %v884
    %886 = vmatpush1.msra.mxu0 %v885
    %887 = vmatprep.subr.mxu0 0.0
    %v888 = vand.u32 %v592, 4294901760
    %v889 = vsub.f32 %v592, %v888
    %890 = vmatpush1.msra.mxu0 %v889
    %891 = vmatprep.subr.mxu0 0.0
    %v892 = vand.u32 %v593, 4294901760
    %v893 = vsub.f32 %v593, %v892
    %894 = vmatpush1.msra.mxu0 %v893
    %895 = vmatprep.subr.mxu0 0.0
    %v896 = vand.u32 %v594, 4294901760
    %v897 = vsub.f32 %v594, %v896
    %898 = vmatpush1.msra.mxu0 %v897
    %899 = vmatprep.subr.mxu0 0.0
    %v900 = vand.u32 %v595, 4294901760
    %v901 = vsub.f32 %v595, %v900
    %902 = vmatpush1.msra.mxu0 %v901
    %903 = vmatprep.subr.mxu0 0.0
    %v904 = vand.u32 %v596, 4294901760
    %v905 = vsub.f32 %v596, %v904
    %906 = vmatpush1.msra.mxu0 %v905
    %907 = vmatprep.subr.mxu0 0.0
    %v908 = vand.u32 %v597, 4294901760
    %v909 = vsub.f32 %v597, %v908
    %910 = vmatpush1.msra.mxu0 %v909
    %911 = vmatprep.subr.mxu0 0.0
    %912 = vmatpush1.msra.mxu0 0.0
    %913 = vmatprep.subr.mxu0 0.0
    %914 = vmatpush1.msra.mxu0 0.0
    %915 = vmatprep.subr.mxu0 0.0
    %916 = vmatpush1.msra.mxu0 0.0
    %917 = vmatprep.subr.mxu0 0.0
    %918 = vmatpush1.msra.mxu0 0.0
    %919 = vmatprep.subr.mxu0 0.0
    %920 = vmatpush1.msra.mxu0 0.0
    %921 = vmatprep.subr.mxu0 0.0
    %922 = vmatpush1.msra.mxu0 0.0
    %923 = vmatprep.subr.mxu0 0.0
    %924 = vmatpush1.msra.mxu0 0.0
    %925 = vmatprep.subr.mxu0 0.0
    %926 = vmatpush1.msra.mxu0 0.0
    %927 = vmatprep.subr.mxu0 0.0
    %928 = vmatpush1.msra.mxu0 0.0
    %929 = vmatprep.subr.mxu0 0.0
    %930 = vmatpush1.msra.mxu0 0.0
    %931 = vmatprep.subr.mxu0 0.0
    %932 = vmatpush1.msra.mxu0 0.0
    %933 = vmatprep.subr.mxu0 0.0
    %934 = vmatpush1.msra.mxu0 0.0
    %935 = vmatprep.subr.mxu0 0.0
    %936 = vmatpush1.msra.mxu0 0.0
    %937 = vmatprep.subr.mxu0 0.0
    %938 = vmatpush1.msra.mxu0 0.0
    %939 = vmatprep.subr.mxu0 0.0
    %940 = vmatpush1.msra.mxu0 0.0
    %941 = vmatprep.subr.mxu0 0.0
    %942 = vmatpush1.msra.mxu0 0.0
    %943 = vmatprep.mubr.f32.mxu0 0.0
    %v944 = vand.u32 %v581, 4294901760
    %v945 = vsub.f32 %v581, %v944
    %946 = vmatmul.mubr.f32.gmra.mrb[0].mxu0 %v945
    %v947 = vpop.f32.mrb[0].mxu0
    %v948 = vadd.f32 %v844, %v947
    %v949 = vpop.f32.mrb[0].mxu0
    %950 = vdwg.mxu0
    %951 = vmatprep.subr.mxu0 0.0
    %v952 = vand.u32 %v582, 4294901760
    %953 = vmatpush1.msra.mxu0 %v952
    %954 = vmatprep.subr.mxu0 0.0
    %v955 = vand.u32 %v583, 4294901760
    %956 = vmatpush1.msra.mxu0 %v955
    %957 = vmatprep.subr.mxu0 0.0
    %v958 = vand.u32 %v584, 4294901760
    %959 = vmatpush1.msra.mxu0 %v958
    %960 = vmatprep.subr.mxu0 0.0
    %v961 = vand.u32 %v585, 4294901760
    %962 = vmatpush1.msra.mxu0 %v961
    %963 = vmatprep.subr.mxu0 0.0
    %v964 = vand.u32 %v586, 4294901760
    %965 = vmatpush1.msra.mxu0 %v964
    %966 = vmatprep.subr.mxu0 0.0
    %v967 = vand.u32 %v587, 4294901760
    %968 = vmatpush1.msra.mxu0 %v967
    %969 = vmatprep.subr.mxu0 0.0
    %v970 = vand.u32 %v588, 4294901760
    %971 = vmatpush1.msra.mxu0 %v970
    %972 = vmatprep.subr.mxu0 0.0
    %v973 = vand.u32 %v589, 4294901760
    %974 = vmatpush1.msra.mxu0 %v973
    %975 = vmatprep.subr.mxu0 0.0
    %v976 = vand.u32 %v590, 4294901760
    %977 = vmatpush1.msra.mxu0 %v976
    %978 = vmatprep.subr.mxu0 0.0
    %v979 = vand.u32 %v591, 4294901760
    %980 = vmatpush1.msra.mxu0 %v979
    %981 = vmatprep.subr.mxu0 0.0
    %v982 = vand.u32 %v592, 4294901760
    %983 = vmatpush1.msra.mxu0 %v982
    %984 = vmatprep.subr.mxu0 0.0
    %v985 = vand.u32 %v593, 4294901760
    %986 = vmatpush1.msra.mxu0 %v985
    %987 = vmatprep.subr.mxu0 0.0
    %v988 = vand.u32 %v594, 4294901760
    %989 = vmatpush1.msra.mxu0 %v988
    %990 = vmatprep.subr.mxu0 0.0
    %v991 = vand.u32 %v595, 4294901760
    %992 = vmatpush1.msra.mxu0 %v991
    %993 = vmatprep.subr.mxu0 0.0
    %v994 = vand.u32 %v596, 4294901760
    %995 = vmatpush1.msra.mxu0 %v994
    %996 = vmatprep.subr.mxu0 0.0
    %v997 = vand.u32 %v597, 4294901760
    %998 = vmatpush1.msra.mxu0 %v997
    %999 = vmatprep.subr.mxu0 0.0
    %1000 = vmatpush1.msra.mxu0 0.0
    %1001 = vmatprep.subr.mxu0 0.0
    %1002 = vmatpush1.msra.mxu0 0.0
    %1003 = vmatprep.subr.mxu0 0.0
    %1004 = vmatpush1.msra.mxu0 0.0
    %1005 = vmatprep.subr.mxu0 0.0
    %1006 = vmatpush1.msra.mxu0 0.0
    %1007 = vmatprep.subr.mxu0 0.0
    %1008 = vmatpush1.msra.mxu0 0.0
    %1009 = vmatprep.subr.mxu0 0.0
    %1010 = vmatpush1.msra.mxu0 0.0
    %1011 = vmatprep.subr.mxu0 0.0
    %1012 = vmatpush1.msra.mxu0 0.0
    %1013 = vmatprep.subr.mxu0 0.0
    %1014 = vmatpush1.msra.mxu0 0.0
    %1015 = vmatprep.subr.mxu0 0.0
    %1016 = vmatpush1.msra.mxu0 0.0
    %1017 = vmatprep.subr.mxu0 0.0
    %1018 = vmatpush1.msra.mxu0 0.0
    %1019 = vmatprep.subr.mxu0 0.0
    %1020 = vmatpush1.msra.mxu0 0.0
    %1021 = vmatprep.subr.mxu0 0.0
    %1022 = vmatpush1.msra.mxu0 0.0
    %1023 = vmatprep.subr.mxu0 0.0
    %1024 = vmatpush1.msra.mxu0 0.0
    %1025 = vmatprep.subr.mxu0 0.0
    %1026 = vmatpush1.msra.mxu0 0.0
    %1027 = vmatprep.subr.mxu0 0.0
    %1028 = vmatpush1.msra.mxu0 0.0
    %1029 = vmatprep.subr.mxu0 0.0
    %1030 = vmatpush1.msra.mxu0 0.0
    %1031 = vmatprep.mubr.f32.mxu0 0.0
    %v1032 = vand.u32 %v581, 4294901760
    %v1033 = vsub.f32 %v581, %v1032
    %v1034 = vand.u32 %v1033, 4294901760
    %1035 = vmatmul.mubr.f32.gmra.mrb[0].mxu0 %v1034
    %v1036 = vpop.f32.mrb[0].mxu0
    %v1037 = vadd.f32 %v948, %v1036
    %v1038 = vpop.f32.mrb[0].mxu0
    %1039 = vdwg.mxu0
    %1040 = vmatprep.subr.mxu0 0.0
    %v1041 = vand.u32 %v582, 4294901760
    %v1042 = vsub.f32 %v582, %v1041
    %v1043 = vand.u32 %v1042, 4294901760
    %1044 = vmatpush1.msra.mxu0 %v1043
    %1045 = vmatprep.subr.mxu0 0.0
    %v1046 = vand.u32 %v583, 4294901760
    %v1047 = vsub.f32 %v583, %v1046
    %v1048 = vand.u32 %v1047, 4294901760
    %1049 = vmatpush1.msra.mxu0 %v1048
    %1050 = vmatprep.subr.mxu0 0.0
    %v1051 = vand.u32 %v584, 4294901760
    %v1052 = vsub.f32 %v584, %v1051
    %v1053 = vand.u32 %v1052, 4294901760
    %1054 = vmatpush1.msra.mxu0 %v1053
    %1055 = vmatprep.subr.mxu0 0.0
    %v1056 = vand.u32 %v585, 4294901760
    %v1057 = vsub.f32 %v585, %v1056
    %v1058 = vand.u32 %v1057, 4294901760
    %1059 = vmatpush1.msra.mxu0 %v1058
    %1060 = vmatprep.subr.mxu0 0.0
    %v1061 = vand.u32 %v586, 4294901760
    %v1062 = vsub.f32 %v586, %v1061
    %v1063 = vand.u32 %v1062, 4294901760
    %1064 = vmatpush1.msra.mxu0 %v1063
    %1065 = vmatprep.subr.mxu0 0.0
    %v1066 = vand.u32 %v587, 4294901760
    %v1067 = vsub.f32 %v587, %v1066
    %v1068 = vand.u32 %v1067, 4294901760
    %1069 = vmatpush1.msra.mxu0 %v1068
    %1070 = vmatprep.subr.mxu0 0.0
    %v1071 = vand.u32 %v588, 4294901760
    %v1072 = vsub.f32 %v588, %v1071
    %v1073 = vand.u32 %v1072, 4294901760
    %1074 = vmatpush1.msra.mxu0 %v1073
    %1075 = vmatprep.subr.mxu0 0.0
    %v1076 = vand.u32 %v589, 4294901760
    %v1077 = vsub.f32 %v589, %v1076
    %v1078 = vand.u32 %v1077, 4294901760
    %1079 = vmatpush1.msra.mxu0 %v1078
    %1080 = vmatprep.subr.mxu0 0.0
    %v1081 = vand.u32 %v590, 4294901760
    %v1082 = vsub.f32 %v590, %v1081
    %v1083 = vand.u32 %v1082, 4294901760
    %1084 = vmatpush1.msra.mxu0 %v1083
    %1085 = vmatprep.subr.mxu0 0.0
    %v1086 = vand.u32 %v591, 4294901760
    %v1087 = vsub.f32 %v591, %v1086
    %v1088 = vand.u32 %v1087, 4294901760
    %1089 = vmatpush1.msra.mxu0 %v1088
    %1090 = vmatprep.subr.mxu0 0.0
    %v1091 = vand.u32 %v592, 4294901760
    %v1092 = vsub.f32 %v592, %v1091
    %v1093 = vand.u32 %v1092, 4294901760
    %1094 = vmatpush1.msra.mxu0 %v1093
    %1095 = vmatprep.subr.mxu0 0.0
    %v1096 = vand.u32 %v593, 4294901760
    %v1097 = vsub.f32 %v593, %v1096
    %v1098 = vand.u32 %v1097, 4294901760
    %1099 = vmatpush1.msra.mxu0 %v1098
    %1100 = vmatprep.subr.mxu0 0.0
    %v1101 = vand.u32 %v594, 4294901760
    %v1102 = vsub.f32 %v594, %v1101
    %v1103 = vand.u32 %v1102, 4294901760
    %1104 = vmatpush1.msra.mxu0 %v1103
    %1105 = vmatprep.subr.mxu0 0.0
    %v1106 = vand.u32 %v595, 4294901760
    %v1107 = vsub.f32 %v595, %v1106
    %v1108 = vand.u32 %v1107, 4294901760
    %1109 = vmatpush1.msra.mxu0 %v1108
    %1110 = vmatprep.subr.mxu0 0.0
    %v1111 = vand.u32 %v596, 4294901760
    %v1112 = vsub.f32 %v596, %v1111
    %v1113 = vand.u32 %v1112, 4294901760
    %1114 = vmatpush1.msra.mxu0 %v1113
    %1115 = vmatprep.subr.mxu0 0.0
    %v1116 = vand.u32 %v597, 4294901760
    %v1117 = vsub.f32 %v597, %v1116
    %v1118 = vand.u32 %v1117, 4294901760
    %1119 = vmatpush1.msra.mxu0 %v1118
    %1120 = vmatprep.subr.mxu0 0.0
    %1121 = vmatpush1.msra.mxu0 0.0
    %1122 = vmatprep.subr.mxu0 0.0
    %1123 = vmatpush1.msra.mxu0 0.0
    %1124 = vmatprep.subr.mxu0 0.0
    %1125 = vmatpush1.msra.mxu0 0.0
    %1126 = vmatprep.subr.mxu0 0.0
    %1127 = vmatpush1.msra.mxu0 0.0
    %1128 = vmatprep.subr.mxu0 0.0
    %1129 = vmatpush1.msra.mxu0 0.0
    %1130 = vmatprep.subr.mxu0 0.0
    %1131 = vmatpush1.msra.mxu0 0.0
    %1132 = vmatprep.subr.mxu0 0.0
    %1133 = vmatpush1.msra.mxu0 0.0
    %1134 = vmatprep.subr.mxu0 0.0
    %1135 = vmatpush1.msra.mxu0 0.0
    %1136 = vmatprep.subr.mxu0 0.0
    %1137 = vmatpush1.msra.mxu0 0.0
    %1138 = vmatprep.subr.mxu0 0.0
    %1139 = vmatpush1.msra.mxu0 0.0
    %1140 = vmatprep.subr.mxu0 0.0
    %1141 = vmatpush1.msra.mxu0 0.0
    %1142 = vmatprep.subr.mxu0 0.0
    %1143 = vmatpush1.msra.mxu0 0.0
    %1144 = vmatprep.subr.mxu0 0.0
    %1145 = vmatpush1.msra.mxu0 0.0
    %1146 = vmatprep.subr.mxu0 0.0
    %1147 = vmatpush1.msra.mxu0 0.0
    %1148 = vmatprep.subr.mxu0 0.0
    %1149 = vmatpush1.msra.mxu0 0.0
    %1150 = vmatprep.subr.mxu0 0.0
    %1151 = vmatpush1.msra.mxu0 0.0
    %1152 = vmatprep.mubr.f32.mxu0 0.0
    %v1153 = vand.u32 %v581, 4294901760
    %1154 = vmatmul.mubr.f32.gmra.mrb[0].mxu0 %v1153
    %v1155 = vpop.f32.mrb[0].mxu0
    %v1156 = vadd.f32 %v1037, %v1155
    %v1157 = vpop.f32.mrb[0].mxu0
    %1158 = vdwg.mxu0
    %1159 = vmatprep.subr.mxu0 0.0
    %v1160 = vand.u32 %v582, 4294901760
    %1161 = vmatpush1.msra.mxu0 %v1160
    %1162 = vmatprep.subr.mxu0 0.0
    %v1163 = vand.u32 %v583, 4294901760
    %1164 = vmatpush1.msra.mxu0 %v1163
    %1165 = vmatprep.subr.mxu0 0.0
    %v1166 = vand.u32 %v584, 4294901760
    %1167 = vmatpush1.msra.mxu0 %v1166
    %1168 = vmatprep.subr.mxu0 0.0
    %v1169 = vand.u32 %v585, 4294901760
    %1170 = vmatpush1.msra.mxu0 %v1169
    %1171 = vmatprep.subr.mxu0 0.0
    %v1172 = vand.u32 %v586, 4294901760
    %1173 = vmatpush1.msra.mxu0 %v1172
    %1174 = vmatprep.subr.mxu0 0.0
    %v1175 = vand.u32 %v587, 4294901760
    %1176 = vmatpush1.msra.mxu0 %v1175
    %1177 = vmatprep.subr.mxu0 0.0
    %v1178 = vand.u32 %v588, 4294901760
    %1179 = vmatpush1.msra.mxu0 %v1178
    %1180 = vmatprep.subr.mxu0 0.0
    %v1181 = vand.u32 %v589, 4294901760
    %1182 = vmatpush1.msra.mxu0 %v1181
    %1183 = vmatprep.subr.mxu0 0.0
    %v1184 = vand.u32 %v590, 4294901760
    %1185 = vmatpush1.msra.mxu0 %v1184
    %1186 = vmatprep.subr.mxu0 0.0
    %v1187 = vand.u32 %v591, 4294901760
    %1188 = vmatpush1.msra.mxu0 %v1187
    %1189 = vmatprep.subr.mxu0 0.0
    %v1190 = vand.u32 %v592, 4294901760
    %1191 = vmatpush1.msra.mxu0 %v1190
    %1192 = vmatprep.subr.mxu0 0.0
    %v1193 = vand.u32 %v593, 4294901760
    %1194 = vmatpush1.msra.mxu0 %v1193
    %1195 = vmatprep.subr.mxu0 0.0
    %v1196 = vand.u32 %v594, 4294901760
    %1197 = vmatpush1.msra.mxu0 %v1196
    %1198 = vmatprep.subr.mxu0 0.0
    %v1199 = vand.u32 %v595, 4294901760
    %1200 = vmatpush1.msra.mxu0 %v1199
    %1201 = vmatprep.subr.mxu0 0.0
    %v1202 = vand.u32 %v596, 4294901760
    %1203 = vmatpush1.msra.mxu0 %v1202
    %1204 = vmatprep.subr.mxu0 0.0
    %v1205 = vand.u32 %v597, 4294901760
    %1206 = vmatpush1.msra.mxu0 %v1205
    %1207 = vmatprep.subr.mxu0 0.0
    %1208 = vmatpush1.msra.mxu0 0.0
    %1209 = vmatprep.subr.mxu0 0.0
    %1210 = vmatpush1.msra.mxu0 0.0
    %1211 = vmatprep.subr.mxu0 0.0
    %1212 = vmatpush1.msra.mxu0 0.0
    %1213 = vmatprep.subr.mxu0 0.0
    %1214 = vmatpush1.msra.mxu0 0.0
    %1215 = vmatprep.subr.mxu0 0.0
    %1216 = vmatpush1.msra.mxu0 0.0
    %1217 = vmatprep.subr.mxu0 0.0
    %1218 = vmatpush1.msra.mxu0 0.0
    %1219 = vmatprep.subr.mxu0 0.0
    %1220 = vmatpush1.msra.mxu0 0.0
    %1221 = vmatprep.subr.mxu0 0.0
    %1222 = vmatpush1.msra.mxu0 0.0
    %1223 = vmatprep.subr.mxu0 0.0
    %1224 = vmatpush1.msra.mxu0 0.0
    %1225 = vmatprep.subr.mxu0 0.0
    %1226 = vmatpush1.msra.mxu0 0.0
    %1227 = vmatprep.subr.mxu0 0.0
    %1228 = vmatpush1.msra.mxu0 0.0
    %1229 = vmatprep.subr.mxu0 0.0
    %1230 = vmatpush1.msra.mxu0 0.0
    %1231 = vmatprep.subr.mxu0 0.0
    %1232 = vmatpush1.msra.mxu0 0.0
    %1233 = vmatprep.subr.mxu0 0.0
    %1234 = vmatpush1.msra.mxu0 0.0
    %1235 = vmatprep.subr.mxu0 0.0
    %1236 = vmatpush1.msra.mxu0 0.0
    %1237 = vmatprep.subr.mxu0 0.0
    %1238 = vmatpush1.msra.mxu0 0.0
    %1239 = vmatprep.mubr.f32.mxu0 0.0
    %v1240 = vand.u32 %v581, 4294901760
    %1241 = vmatmul.mubr.f32.gmra.mrb[0].mxu0 %v1240
    %v1242 = vpop.f32.mrb[0].mxu0
    %v1243 = vadd.f32 %v1156, %v1242
    %v1244 = vpop.f32.mrb[0].mxu0
    %1245 = vdwg.mxu0
    %v1246 = vtanh.pop %v1243
    %v1247 = vld [vmem:[#allocation8] sm:$0xff]
    %v1248 = vld [vmem:[#allocation8 + $0x8] sm:$0xff]
    %v1249 = vld [vmem:[#allocation8 + $0x10] sm:$0xff]
    %v1250 = vld [vmem:[#allocation8 + $0x18] sm:$0xff]
    %v1251 = vld [vmem:[#allocation8 + $0x20] sm:$0xff]
    %v1252 = vld [vmem:[#allocation8 + $0x28] sm:$0xff]
    %v1253 = vld [vmem:[#allocation8 + $0x30] sm:$0xff]
    %v1254 = vld [vmem:[#allocation8 + $0x38] sm:$0xff]
    %v1255 = vld [vmem:[#allocation8 + $0x40] sm:$0xff]
    %v1256 = vld [vmem:[#allocation8 + $0x48] sm:$0xff]
    %v1257 = vld [vmem:[#allocation8 + $0x50] sm:$0xff]
    %v1258 = vld [vmem:[#allocation8 + $0x58] sm:$0xff]
    %v1259 = vld [vmem:[#allocation8 + $0x60] sm:$0xff]
    %v1260 = vld [vmem:[#allocation8 + $0x68] sm:$0xff]
    %v1261 = vld [vmem:[#allocation8 + $0x70] sm:$0xff]
    %v1262 = vld [vmem:[#allocation8 + $0x78] sm:$0xff]
    %v1263 = vld [vmem:[%s6] sm:$0x1]
    %v1265 = vlaneseq
    %v1266 = vshrl.u32 %v1265, 7
    %v1267 = vsub.s32 0, %v1266
    %v1268 = vrot.slane %v1263, %v1267
    %1270 = vmatprep.subr.mxu0 0.0
    %v1271 = vand.u32 %v1247, 4294901760
    %1272 = vmatpush1.msra.mxu0 %v1271
    %1273 = vmatprep.subr.mxu0 0.0
    %v1274 = vand.u32 %v1248, 4294901760
    %1275 = vmatpush1.msra.mxu0 %v1274
    %1276 = vmatprep.subr.mxu0 0.0
    %v1277 = vand.u32 %v1249, 4294901760
    %1278 = vmatpush1.msra.mxu0 %v1277
    %1279 = vmatprep.subr.mxu0 0.0
    %v1280 = vand.u32 %v1250, 4294901760
    %1281 = vmatpush1.msra.mxu0 %v1280
    %1282 = vmatprep.subr.mxu0 0.0
    %v1283 = vand.u32 %v1251, 4294901760
    %1284 = vmatpush1.msra.mxu0 %v1283
    %1285 = vmatprep.subr.mxu0 0.0
    %v1286 = vand.u32 %v1252, 4294901760
    %1287 = vmatpush1.msra.mxu0 %v1286
    %1288 = vmatprep.subr.mxu0 0.0
    %v1289 = vand.u32 %v1253, 4294901760
    %1290 = vmatpush1.msra.mxu0 %v1289
    %1291 = vmatprep.subr.mxu0 0.0
    %v1292 = vand.u32 %v1254, 4294901760
    %1293 = vmatpush1.msra.mxu0 %v1292
    %1294 = vmatprep.subr.mxu0 0.0
    %v1295 = vand.u32 %v1255, 4294901760
    %1296 = vmatpush1.msra.mxu0 %v1295
    %1297 = vmatprep.subr.mxu0 0.0
    %v1298 = vand.u32 %v1256, 4294901760
    %1299 = vmatpush1.msra.mxu0 %v1298
    %1300 = vmatprep.subr.mxu0 0.0
    %v1301 = vand.u32 %v1257, 4294901760
    %1302 = vmatpush1.msra.mxu0 %v1301
    %1303 = vmatprep.subr.mxu0 0.0
    %v1304 = vand.u32 %v1258, 4294901760
    %1305 = vmatpush1.msra.mxu0 %v1304
    %1306 = vmatprep.subr.mxu0 0.0
    %v1307 = vand.u32 %v1259, 4294901760
    %1308 = vmatpush1.msra.mxu0 %v1307
    %1309 = vmatprep.subr.mxu0 0.0
    %v1310 = vand.u32 %v1260, 4294901760
    %1311 = vmatpush1.msra.mxu0 %v1310
    %1312 = vmatprep.subr.mxu0 0.0
    %v1313 = vand.u32 %v1261, 4294901760
    %1314 = vmatpush1.msra.mxu0 %v1313
    %1315 = vmatprep.subr.mxu0 0.0
    %v1316 = vand.u32 %v1262, 4294901760
    %1317 = vmatpush1.msra.mxu0 %v1316
    %1318 = vmatprep.subr.mxu0 0.0
    %1319 = vmatpush1.msra.mxu0 0.0
    %1320 = vmatprep.subr.mxu0 0.0
    %1321 = vmatpush1.msra.mxu0 0.0
    %1322 = vmatprep.subr.mxu0 0.0
    %1323 = vmatpush1.msra.mxu0 0.0
    %1324 = vmatprep.subr.mxu0 0.0
    %1325 = vmatpush1.msra.mxu0 0.0
    %1326 = vmatprep.subr.mxu0 0.0
    %1327 = vmatpush1.msra.mxu0 0.0
    %1328 = vmatprep.subr.mxu0 0.0
    %1329 = vmatpush1.msra.mxu0 0.0
    %1330 = vmatprep.subr.mxu0 0.0
    %1331 = vmatpush1.msra.mxu0 0.0
    %1332 = vmatprep.subr.mxu0 0.0
    %1333 = vmatpush1.msra.mxu0 0.0
    %1334 = vmatprep.subr.mxu0 0.0
    %1335 = vmatpush1.msra.mxu0 0.0
    %1336 = vmatprep.subr.mxu0 0.0
    %1337 = vmatpush1.msra.mxu0 0.0
    %1338 = vmatprep.subr.mxu0 0.0
    %1339 = vmatpush1.msra.mxu0 0.0
    %1340 = vmatprep.subr.mxu0 0.0
    %1341 = vmatpush1.msra.mxu0 0.0
    %1342 = vmatprep.subr.mxu0 0.0
    %1343 = vmatpush1.msra.mxu0 0.0
    %1344 = vmatprep.subr.mxu0 0.0
    %1345 = vmatpush1.msra.mxu0 0.0
    %1346 = vmatprep.subr.mxu0 0.0
    %1347 = vmatpush1.msra.mxu0 0.0
    %1348 = vmatprep.subr.mxu0 0.0
    %1349 = vmatpush1.msra.mxu0 0.0
    %1350 = vmatprep.mubr.f32.mxu0 0.0
    %v1351 = vand.u32 %v1246, 4294901760
    %v1352 = vsub.f32 %v1246, %v1351
    %v1353 = vand.u32 %v1352, 4294901760
    %v1354 = vsub.f32 %v1352, %v1353
    %v1355 = vand.u32 %v1354, 4294901760
    %1356 = vmatmul.mubr.f32.gmra.mrb[0].mxu0 %v1355
    %v1357 = vpop.f32.mrb[0].mxu0
    %v1358 = vadd.f32 %v1268, %v1357
    %v1359 = vpop.f32.mrb[0].mxu0
    %1360 = vdwg.mxu0
    %1361 = vmatprep.subr.mxu0 0.0
    %v1362 = vand.u32 %v1247, 4294901760
    %v1363 = vsub.f32 %v1247, %v1362
    %v1364 = vand.u32 %v1363, 4294901760
    %v1365 = vsub.f32 %v1363, %v1364
    %v1366 = vand.u32 %v1365, 4294901760
    %1367 = vmatpush1.msra.mxu0 %v1366
    %1368 = vmatprep.subr.mxu0 0.0
    %v1369 = vand.u32 %v1248, 4294901760
    %v1370 = vsub.f32 %v1248, %v1369
    %v1371 = vand.u32 %v1370, 4294901760
    %v1372 = vsub.f32 %v1370, %v1371
    %v1373 = vand.u32 %v1372, 4294901760
    %1374 = vmatpush1.msra.mxu0 %v1373
    %1375 = vmatprep.subr.mxu0 0.0
    %v1376 = vand.u32 %v1249, 4294901760
    %v1377 = vsub.f32 %v1249, %v1376
    %v1378 = vand.u32 %v1377, 4294901760
    %v1379 = vsub.f32 %v1377, %v1378
    %v1380 = vand.u32 %v1379, 4294901760
    %1381 = vmatpush1.msra.mxu0 %v1380
    %1382 = vmatprep.subr.mxu0 0.0
    %v1383 = vand.u32 %v1250, 4294901760
    %v1384 = vsub.f32 %v1250, %v1383
    %v1385 = vand.u32 %v1384, 4294901760
    %v1386 = vsub.f32 %v1384, %v1385
    %v1387 = vand.u32 %v1386, 4294901760
    %1388 = vmatpush1.msra.mxu0 %v1387
    %1389 = vmatprep.subr.mxu0 0.0
    %v1390 = vand.u32 %v1251, 4294901760
    %v1391 = vsub.f32 %v1251, %v1390
    %v1392 = vand.u32 %v1391, 4294901760
    %v1393 = vsub.f32 %v1391, %v1392
    %v1394 = vand.u32 %v1393, 4294901760
    %1395 = vmatpush1.msra.mxu0 %v1394
    %1396 = vmatprep.subr.mxu0 0.0
    %v1397 = vand.u32 %v1252, 4294901760
    %v1398 = vsub.f32 %v1252, %v1397
    %v1399 = vand.u32 %v1398, 4294901760
    %v1400 = vsub.f32 %v1398, %v1399
    %v1401 = vand.u32 %v1400, 4294901760
    %1402 = vmatpush1.msra.mxu0 %v1401
    %1403 = vmatprep.subr.mxu0 0.0
    %v1404 = vand.u32 %v1253, 4294901760
    %v1405 = vsub.f32 %v1253, %v1404
    %v1406 = vand.u32 %v1405, 4294901760
    %v1407 = vsub.f32 %v1405, %v1406
    %v1408 = vand.u32 %v1407, 4294901760
    %1409 = vmatpush1.msra.mxu0 %v1408
    %1410 = vmatprep.subr.mxu0 0.0
    %v1411 = vand.u32 %v1254, 4294901760
    %v1412 = vsub.f32 %v1254, %v1411
    %v1413 = vand.u32 %v1412, 4294901760
    %v1414 = vsub.f32 %v1412, %v1413
    %v1415 = vand.u32 %v1414, 4294901760
    %1416 = vmatpush1.msra.mxu0 %v1415
    %1417 = vmatprep.subr.mxu0 0.0
    %v1418 = vand.u32 %v1255, 4294901760
    %v1419 = vsub.f32 %v1255, %v1418
    %v1420 = vand.u32 %v1419, 4294901760
    %v1421 = vsub.f32 %v1419, %v1420
    %v1422 = vand.u32 %v1421, 4294901760
    %1423 = vmatpush1.msra.mxu0 %v1422
    %1424 = vmatprep.subr.mxu0 0.0
    %v1425 = vand.u32 %v1256, 4294901760
    %v1426 = vsub.f32 %v1256, %v1425
    %v1427 = vand.u32 %v1426, 4294901760
    %v1428 = vsub.f32 %v1426, %v1427
    %v1429 = vand.u32 %v1428, 4294901760
    %1430 = vmatpush1.msra.mxu0 %v1429
    %1431 = vmatprep.subr.mxu0 0.0
    %v1432 = vand.u32 %v1257, 4294901760
    %v1433 = vsub.f32 %v1257, %v1432
    %v1434 = vand.u32 %v1433, 4294901760
    %v1435 = vsub.f32 %v1433, %v1434
    %v1436 = vand.u32 %v1435, 4294901760
    %1437 = vmatpush1.msra.mxu0 %v1436
    %1438 = vmatprep.subr.mxu0 0.0
    %v1439 = vand.u32 %v1258, 4294901760
    %v1440 = vsub.f32 %v1258, %v1439
    %v1441 = vand.u32 %v1440, 4294901760
    %v1442 = vsub.f32 %v1440, %v1441
    %v1443 = vand.u32 %v1442, 4294901760
    %1444 = vmatpush1.msra.mxu0 %v1443
    %1445 = vmatprep.subr.mxu0 0.0
    %v1446 = vand.u32 %v1259, 4294901760
    %v1447 = vsub.f32 %v1259, %v1446
    %v1448 = vand.u32 %v1447, 4294901760
    %v1449 = vsub.f32 %v1447, %v1448
    %v1450 = vand.u32 %v1449, 4294901760
    %1451 = vmatpush1.msra.mxu0 %v1450
    %1452 = vmatprep.subr.mxu0 0.0
    %v1453 = vand.u32 %v1260, 4294901760
    %v1454 = vsub.f32 %v1260, %v1453
    %v1455 = vand.u32 %v1454, 4294901760
    %v1456 = vsub.f32 %v1454, %v1455
    %v1457 = vand.u32 %v1456, 4294901760
    %1458 = vmatpush1.msra.mxu0 %v1457
    %1459 = vmatprep.subr.mxu0 0.0
    %v1460 = vand.u32 %v1261, 4294901760
    %v1461 = vsub.f32 %v1261, %v1460
    %v1462 = vand.u32 %v1461, 4294901760
    %v1463 = vsub.f32 %v1461, %v1462
    %v1464 = vand.u32 %v1463, 4294901760
    %1465 = vmatpush1.msra.mxu0 %v1464
    %1466 = vmatprep.subr.mxu0 0.0
    %v1467 = vand.u32 %v1262, 4294901760
    %v1468 = vsub.f32 %v1262, %v1467
    %v1469 = vand.u32 %v1468, 4294901760
    %v1470 = vsub.f32 %v1468, %v1469
    %v1471 = vand.u32 %v1470, 4294901760
    %1472 = vmatpush1.msra.mxu0 %v1471
    %1473 = vmatprep.subr.mxu0 0.0
    %1474 = vmatpush1.msra.mxu0 0.0
    %1475 = vmatprep.subr.mxu0 0.0
    %1476 = vmatpush1.msra.mxu0 0.0
    %1477 = vmatprep.subr.mxu0 0.0
    %1478 = vmatpush1.msra.mxu0 0.0
    %1479 = vmatprep.subr.mxu0 0.0
    %1480 = vmatpush1.msra.mxu0 0.0
    %1481 = vmatprep.subr.mxu0 0.0
    %1482 = vmatpush1.msra.mxu0 0.0
    %1483 = vmatprep.subr.mxu0 0.0
    %1484 = vmatpush1.msra.mxu0 0.0
    %1485 = vmatprep.subr.mxu0 0.0
    %1486 = vmatpush1.msra.mxu0 0.0
    %1487 = vmatprep.subr.mxu0 0.0
    %1488 = vmatpush1.msra.mxu0 0.0
    %1489 = vmatprep.subr.mxu0 0.0
    %1490 = vmatpush1.msra.mxu0 0.0
    %1491 = vmatprep.subr.mxu0 0.0
    %1492 = vmatpush1.msra.mxu0 0.0
    %1493 = vmatprep.subr.mxu0 0.0
    %1494 = vmatpush1.msra.mxu0 0.0
    %1495 = vmatprep.subr.mxu0 0.0
    %1496 = vmatpush1.msra.mxu0 0.0
    %1497 = vmatprep.subr.mxu0 0.0
    %1498 = vmatpush1.msra.mxu0 0.0
    %1499 = vmatprep.subr.mxu0 0.0
    %1500 = vmatpush1.msra.mxu0 0.0
    %1501 = vmatprep.subr.mxu0 0.0
    %1502 = vmatpush1.msra.mxu0 0.0
    %1503 = vmatprep.subr.mxu0 0.0
    %1504 = vmatpush1.msra.mxu0 0.0
    %1505 = vmatprep.mubr.f32.mxu0 0.0
    %v1506 = vand.u32 %v1246, 4294901760
    %1507 = vmatmul.mubr.f32.gmra.mrb[0].mxu0 %v1506
    %v1508 = vpop.f32.mrb[0].mxu0
    %v1509 = vadd.f32 %v1358, %v1508
    %v1510 = vpop.f32.mrb[0].mxu0
    %1511 = vdwg.mxu0
    %1512 = vmatprep.subr.mxu0 0.0
    %v1513 = vand.u32 %v1247, 4294901760
    %v1514 = vsub.f32 %v1247, %v1513
    %1515 = vmatpush1.msra.mxu0 %v1514
    %1516 = vmatprep.subr.mxu0 0.0
    %v1517 = vand.u32 %v1248, 4294901760
    %v1518 = vsub.f32 %v1248, %v1517
    %1519 = vmatpush1.msra.mxu0 %v1518
    %1520 = vmatprep.subr.mxu0 0.0
    %v1521 = vand.u32 %v1249, 4294901760
    %v1522 = vsub.f32 %v1249, %v1521
    %1523 = vmatpush1.msra.mxu0 %v1522
    %1524 = vmatprep.subr.mxu0 0.0
    %v1525 = vand.u32 %v1250, 4294901760
    %v1526 = vsub.f32 %v1250, %v1525
    %1527 = vmatpush1.msra.mxu0 %v1526
    %1528 = vmatprep.subr.mxu0 0.0
    %v1529 = vand.u32 %v1251, 4294901760
    %v1530 = vsub.f32 %v1251, %v1529
    %1531 = vmatpush1.msra.mxu0 %v1530
    %1532 = vmatprep.subr.mxu0 0.0
    %v1533 = vand.u32 %v1252, 4294901760
    %v1534 = vsub.f32 %v1252, %v1533
    %1535 = vmatpush1.msra.mxu0 %v1534
    %1536 = vmatprep.subr.mxu0 0.0
    %v1537 = vand.u32 %v1253, 4294901760
    %v1538 = vsub.f32 %v1253, %v1537
    %1539 = vmatpush1.msra.mxu0 %v1538
    %1540 = vmatprep.subr.mxu0 0.0
    %v1541 = vand.u32 %v1254, 4294901760
    %v1542 = vsub.f32 %v1254, %v1541
    %1543 = vmatpush1.msra.mxu0 %v1542
    %1544 = vmatprep.subr.mxu0 0.0
    %v1545 = vand.u32 %v1255, 4294901760
    %v1546 = vsub.f32 %v1255, %v1545
    %1547 = vmatpush1.msra.mxu0 %v1546
    %1548 = vmatprep.subr.mxu0 0.0
    %v1549 = vand.u32 %v1256, 4294901760
    %v1550 = vsub.f32 %v1256, %v1549
    %1551 = vmatpush1.msra.mxu0 %v1550
    %1552 = vmatprep.subr.mxu0 0.0
    %v1553 = vand.u32 %v1257, 4294901760
    %v1554 = vsub.f32 %v1257, %v1553
    %1555 = vmatpush1.msra.mxu0 %v1554
    %1556 = vmatprep.subr.mxu0 0.0
    %v1557 = vand.u32 %v1258, 4294901760
    %v1558 = vsub.f32 %v1258, %v1557
    %1559 = vmatpush1.msra.mxu0 %v1558
    %1560 = vmatprep.subr.mxu0 0.0
    %v1561 = vand.u32 %v1259, 4294901760
    %v1562 = vsub.f32 %v1259, %v1561
    %1563 = vmatpush1.msra.mxu0 %v1562
    %1564 = vmatprep.subr.mxu0 0.0
    %v1565 = vand.u32 %v1260, 4294901760
    %v1566 = vsub.f32 %v1260, %v1565
    %1567 = vmatpush1.msra.mxu0 %v1566
    %1568 = vmatprep.subr.mxu0 0.0
    %v1569 = vand.u32 %v1261, 4294901760
    %v1570 = vsub.f32 %v1261, %v1569
    %1571 = vmatpush1.msra.mxu0 %v1570
    %1572 = vmatprep.subr.mxu0 0.0
    %v1573 = vand.u32 %v1262, 4294901760
    %v1574 = vsub.f32 %v1262, %v1573
    %1575 = vmatpush1.msra.mxu0 %v1574
    %1576 = vmatprep.subr.mxu0 0.0
    %1577 = vmatpush1.msra.mxu0 0.0
    %1578 = vmatprep.subr.mxu0 0.0
    %1579 = vmatpush1.msra.mxu0 0.0
    %1580 = vmatprep.subr.mxu0 0.0
    %1581 = vmatpush1.msra.mxu0 0.0
    %1582 = vmatprep.subr.mxu0 0.0
    %1583 = vmatpush1.msra.mxu0 0.0
    %1584 = vmatprep.subr.mxu0 0.0
    %1585 = vmatpush1.msra.mxu0 0.0
    %1586 = vmatprep.subr.mxu0 0.0
    %1587 = vmatpush1.msra.mxu0 0.0
    %1588 = vmatprep.subr.mxu0 0.0
    %1589 = vmatpush1.msra.mxu0 0.0
    %1590 = vmatprep.subr.mxu0 0.0
    %1591 = vmatpush1.msra.mxu0 0.0
    %1592 = vmatprep.subr.mxu0 0.0
    %1593 = vmatpush1.msra.mxu0 0.0
    %1594 = vmatprep.subr.mxu0 0.0
    %1595 = vmatpush1.msra.mxu0 0.0
    %1596 = vmatprep.subr.mxu0 0.0
    %1597 = vmatpush1.msra.mxu0 0.0
    %1598 = vmatprep.subr.mxu0 0.0
    %1599 = vmatpush1.msra.mxu0 0.0
    %1600 = vmatprep.subr.mxu0 0.0
    %1601 = vmatpush1.msra.mxu0 0.0
    %1602 = vmatprep.subr.mxu0 0.0
    %1603 = vmatpush1.msra.mxu0 0.0
    %1604 = vmatprep.subr.mxu0 0.0
    %1605 = vmatpush1.msra.mxu0 0.0
    %1606 = vmatprep.subr.mxu0 0.0
    %1607 = vmatpush1.msra.mxu0 0.0
    %1608 = vmatprep.mubr.f32.mxu0 0.0
    %v1609 = vand.u32 %v1246, 4294901760
    %v1610 = vsub.f32 %v1246, %v1609
    %1611 = vmatmul.mubr.f32.gmra.mrb[0].mxu0 %v1610
    %v1612 = vpop.f32.mrb[0].mxu0
    %v1613 = vadd.f32 %v1509, %v1612
    %v1614 = vpop.f32.mrb[0].mxu0
    %1615 = vdwg.mxu0
    %1616 = vmatprep.subr.mxu0 0.0
    %v1617 = vand.u32 %v1247, 4294901760
    %1618 = vmatpush1.msra.mxu0 %v1617
    %1619 = vmatprep.subr.mxu0 0.0
    %v1620 = vand.u32 %v1248, 4294901760
    %1621 = vmatpush1.msra.mxu0 %v1620
    %1622 = vmatprep.subr.mxu0 0.0
    %v1623 = vand.u32 %v1249, 4294901760
    %1624 = vmatpush1.msra.mxu0 %v1623
    %1625 = vmatprep.subr.mxu0 0.0
    %v1626 = vand.u32 %v1250, 4294901760
    %1627 = vmatpush1.msra.mxu0 %v1626
    %1628 = vmatprep.subr.mxu0 0.0
    %v1629 = vand.u32 %v1251, 4294901760
    %1630 = vmatpush1.msra.mxu0 %v1629
    %1631 = vmatprep.subr.mxu0 0.0
    %v1632 = vand.u32 %v1252, 4294901760
    %1633 = vmatpush1.msra.mxu0 %v1632
    %1634 = vmatprep.subr.mxu0 0.0
    %v1635 = vand.u32 %v1253, 4294901760
    %1636 = vmatpush1.msra.mxu0 %v1635
    %1637 = vmatprep.subr.mxu0 0.0
    %v1638 = vand.u32 %v1254, 4294901760
    %1639 = vmatpush1.msra.mxu0 %v1638
    %1640 = vmatprep.subr.mxu0 0.0
    %v1641 = vand.u32 %v1255, 4294901760
    %1642 = vmatpush1.msra.mxu0 %v1641
    %1643 = vmatprep.subr.mxu0 0.0
    %v1644 = vand.u32 %v1256, 4294901760
    %1645 = vmatpush1.msra.mxu0 %v1644
    %1646 = vmatprep.subr.mxu0 0.0
    %v1647 = vand.u32 %v1257, 4294901760
    %1648 = vmatpush1.msra.mxu0 %v1647
    %1649 = vmatprep.subr.mxu0 0.0
    %v1650 = vand.u32 %v1258, 4294901760
    %1651 = vmatpush1.msra.mxu0 %v1650
    %1652 = vmatprep.subr.mxu0 0.0
    %v1653 = vand.u32 %v1259, 4294901760
    %1654 = vmatpush1.msra.mxu0 %v1653
    %1655 = vmatprep.subr.mxu0 0.0
    %v1656 = vand.u32 %v1260, 4294901760
    %1657 = vmatpush1.msra.mxu0 %v1656
    %1658 = vmatprep.subr.mxu0 0.0
    %v1659 = vand.u32 %v1261, 4294901760
    %1660 = vmatpush1.msra.mxu0 %v1659
    %1661 = vmatprep.subr.mxu0 0.0
    %v1662 = vand.u32 %v1262, 4294901760
    %1663 = vmatpush1.msra.mxu0 %v1662
    %1664 = vmatprep.subr.mxu0 0.0
    %1665 = vmatpush1.msra.mxu0 0.0
    %1666 = vmatprep.subr.mxu0 0.0
    %1667 = vmatpush1.msra.mxu0 0.0
    %1668 = vmatprep.subr.mxu0 0.0
    %1669 = vmatpush1.msra.mxu0 0.0
    %1670 = vmatprep.subr.mxu0 0.0
    %1671 = vmatpush1.msra.mxu0 0.0
    %1672 = vmatprep.subr.mxu0 0.0
    %1673 = vmatpush1.msra.mxu0 0.0
    %1674 = vmatprep.subr.mxu0 0.0
    %1675 = vmatpush1.msra.mxu0 0.0
    %1676 = vmatprep.subr.mxu0 0.0
    %1677 = vmatpush1.msra.mxu0 0.0
    %1678 = vmatprep.subr.mxu0 0.0
    %1679 = vmatpush1.msra.mxu0 0.0
    %1680 = vmatprep.subr.mxu0 0.0
    %1681 = vmatpush1.msra.mxu0 0.0
    %1682 = vmatprep.subr.mxu0 0.0
    %1683 = vmatpush1.msra.mxu0 0.0
    %1684 = vmatprep.subr.mxu0 0.0
    %1685 = vmatpush1.msra.mxu0 0.0
    %1686 = vmatprep.subr.mxu0 0.0
    %1687 = vmatpush1.msra.mxu0 0.0
    %1688 = vmatprep.subr.mxu0 0.0
    %1689 = vmatpush1.msra.mxu0 0.0
    %1690 = vmatprep.subr.mxu0 0.0
    %1691 = vmatpush1.msra.mxu0 0.0
    %1692 = vmatprep.subr.mxu0 0.0
    %1693 = vmatpush1.msra.mxu0 0.0
    %1694 = vmatprep.subr.mxu0 0.0
    %1695 = vmatpush1.msra.mxu0 0.0
    %1696 = vmatprep.mubr.f32.mxu0 0.0
    %v1697 = vand.u32 %v1246, 4294901760
    %v1698 = vsub.f32 %v1246, %v1697
    %v1699 = vand.u32 %v1698, 4294901760
    %1700 = vmatmul.mubr.f32.gmra.mrb[0].mxu0 %v1699
    %v1701 = vpop.f32.mrb[0].mxu0
    %v1702 = vadd.f32 %v1613, %v1701
    %v1703 = vpop.f32.mrb[0].mxu0
    %1704 = vdwg.mxu0
    %1705 = vmatprep.subr.mxu0 0.0
    %v1706 = vand.u32 %v1247, 4294901760
    %v1707 = vsub.f32 %v1247, %v1706
    %v1708 = vand.u32 %v1707, 4294901760
    %1709 = vmatpush1.msra.mxu0 %v1708
    %1710 = vmatprep.subr.mxu0 0.0
    %v1711 = vand.u32 %v1248, 4294901760
    %v1712 = vsub.f32 %v1248, %v1711
    %v1713 = vand.u32 %v1712, 4294901760
    %1714 = vmatpush1.msra.mxu0 %v1713
    %1715 = vmatprep.subr.mxu0 0.0
    %v1716 = vand.u32 %v1249, 4294901760
    %v1717 = vsub.f32 %v1249, %v1716
    %v1718 = vand.u32 %v1717, 4294901760
    %1719 = vmatpush1.msra.mxu0 %v1718
    %1720 = vmatprep.subr.mxu0 0.0
    %v1721 = vand.u32 %v1250, 4294901760
    %v1722 = vsub.f32 %v1250, %v1721
    %v1723 = vand.u32 %v1722, 4294901760
    %1724 = vmatpush1.msra.mxu0 %v1723
    %1725 = vmatprep.subr.mxu0 0.0
    %v1726 = vand.u32 %v1251, 4294901760
    %v1727 = vsub.f32 %v1251, %v1726
    %v1728 = vand.u32 %v1727, 4294901760
    %1729 = vmatpush1.msra.mxu0 %v1728
    %1730 = vmatprep.subr.mxu0 0.0
    %v1731 = vand.u32 %v1252, 4294901760
    %v1732 = vsub.f32 %v1252, %v1731
    %v1733 = vand.u32 %v1732, 4294901760
    %1734 = vmatpush1.msra.mxu0 %v1733
    %1735 = vmatprep.subr.mxu0 0.0
    %v1736 = vand.u32 %v1253, 4294901760
    %v1737 = vsub.f32 %v1253, %v1736
    %v1738 = vand.u32 %v1737, 4294901760
    %1739 = vmatpush1.msra.mxu0 %v1738
    %1740 = vmatprep.subr.mxu0 0.0
    %v1741 = vand.u32 %v1254, 4294901760
    %v1742 = vsub.f32 %v1254, %v1741
    %v1743 = vand.u32 %v1742, 4294901760
    %1744 = vmatpush1.msra.mxu0 %v1743
    %1745 = vmatprep.subr.mxu0 0.0
    %v1746 = vand.u32 %v1255, 4294901760
    %v1747 = vsub.f32 %v1255, %v1746
    %v1748 = vand.u32 %v1747, 4294901760
    %1749 = vmatpush1.msra.mxu0 %v1748
    %1750 = vmatprep.subr.mxu0 0.0
    %v1751 = vand.u32 %v1256, 4294901760
    %v1752 = vsub.f32 %v1256, %v1751
    %v1753 = vand.u32 %v1752, 4294901760
    %1754 = vmatpush1.msra.mxu0 %v1753
    %1755 = vmatprep.subr.mxu0 0.0
    %v1756 = vand.u32 %v1257, 4294901760
    %v1757 = vsub.f32 %v1257, %v1756
    %v1758 = vand.u32 %v1757, 4294901760
    %1759 = vmatpush1.msra.mxu0 %v1758
    %1760 = vmatprep.subr.mxu0 0.0
    %v1761 = vand.u32 %v1258, 4294901760
    %v1762 = vsub.f32 %v1258, %v1761
    %v1763 = vand.u32 %v1762, 4294901760
    %1764 = vmatpush1.msra.mxu0 %v1763
    %1765 = vmatprep.subr.mxu0 0.0
    %v1766 = vand.u32 %v1259, 4294901760
    %v1767 = vsub.f32 %v1259, %v1766
    %v1768 = vand.u32 %v1767, 4294901760
    %1769 = vmatpush1.msra.mxu0 %v1768
    %1770 = vmatprep.subr.mxu0 0.0
    %v1771 = vand.u32 %v1260, 4294901760
    %v1772 = vsub.f32 %v1260, %v1771
    %v1773 = vand.u32 %v1772, 4294901760
    %1774 = vmatpush1.msra.mxu0 %v1773
    %1775 = vmatprep.subr.mxu0 0.0
    %v1776 = vand.u32 %v1261, 4294901760
    %v1777 = vsub.f32 %v1261, %v1776
    %v1778 = vand.u32 %v1777, 4294901760
    %1779 = vmatpush1.msra.mxu0 %v1778
    %1780 = vmatprep.subr.mxu0 0.0
    %v1781 = vand.u32 %v1262, 4294901760
    %v1782 = vsub.f32 %v1262, %v1781
    %v1783 = vand.u32 %v1782, 4294901760
    %1784 = vmatpush1.msra.mxu0 %v1783
    %1785 = vmatprep.subr.mxu0 0.0
    %1786 = vmatpush1.msra.mxu0 0.0
    %1787 = vmatprep.subr.mxu0 0.0
    %1788 = vmatpush1.msra.mxu0 0.0
    %1789 = vmatprep.subr.mxu0 0.0
    %1790 = vmatpush1.msra.mxu0 0.0
    %1791 = vmatprep.subr.mxu0 0.0
    %1792 = vmatpush1.msra.mxu0 0.0
    %1793 = vmatprep.subr.mxu0 0.0
    %1794 = vmatpush1.msra.mxu0 0.0
    %1795 = vmatprep.subr.mxu0 0.0
    %1796 = vmatpush1.msra.mxu0 0.0
    %1797 = vmatprep.subr.mxu0 0.0
    %1798 = vmatpush1.msra.mxu0 0.0
    %1799 = vmatprep.subr.mxu0 0.0
    %1800 = vmatpush1.msra.mxu0 0.0
    %1801 = vmatprep.subr.mxu0 0.0
    %1802 = vmatpush1.msra.mxu0 0.0
    %1803 = vmatprep.subr.mxu0 0.0
    %1804 = vmatpush1.msra.mxu0 0.0
    %1805 = vmatprep.subr.mxu0 0.0
    %1806 = vmatpush1.msra.mxu0 0.0
    %1807 = vmatprep.subr.mxu0 0.0
    %1808 = vmatpush1.msra.mxu0 0.0
    %1809 = vmatprep.subr.mxu0 0.0
    %1810 = vmatpush1.msra.mxu0 0.0
    %1811 = vmatprep.subr.mxu0 0.0
    %1812 = vmatpush1.msra.mxu0 0.0
    %1813 = vmatprep.subr.mxu0 0.0
    %1814 = vmatpush1.msra.mxu0 0.0
    %1815 = vmatprep.subr.mxu0 0.0
    %1816 = vmatpush1.msra.mxu0 0.0
    %1817 = vmatprep.mubr.f32.mxu0 0.0
    %v1818 = vand.u32 %v1246, 4294901760
    %1819 = vmatmul.mubr.f32.gmra.mrb[0].mxu0 %v1818
    %v1820 = vpop.f32.mrb[0].mxu0
    %v1821 = vadd.f32 %v1702, %v1820
    %v1822 = vpop.f32.mrb[0].mxu0
    %1823 = vdwg.mxu0
    %1824 = vmatprep.subr.mxu0 0.0
    %v1825 = vand.u32 %v1247, 4294901760
    %1826 = vmatpush1.msra.mxu0 %v1825
    %1827 = vmatprep.subr.mxu0 0.0
    %v1828 = vand.u32 %v1248, 4294901760
    %1829 = vmatpush1.msra.mxu0 %v1828
    %1830 = vmatprep.subr.mxu0 0.0
    %v1831 = vand.u32 %v1249, 4294901760
    %1832 = vmatpush1.msra.mxu0 %v1831
    %1833 = vmatprep.subr.mxu0 0.0
    %v1834 = vand.u32 %v1250, 4294901760
    %1835 = vmatpush1.msra.mxu0 %v1834
    %1836 = vmatprep.subr.mxu0 0.0
    %v1837 = vand.u32 %v1251, 4294901760
    %1838 = vmatpush1.msra.mxu0 %v1837
    %1839 = vmatprep.subr.mxu0 0.0
    %v1840 = vand.u32 %v1252, 4294901760
    %1841 = vmatpush1.msra.mxu0 %v1840
    %1842 = vmatprep.subr.mxu0 0.0
    %v1843 = vand.u32 %v1253, 4294901760
    %1844 = vmatpush1.msra.mxu0 %v1843
    %1845 = vmatprep.subr.mxu0 0.0
    %v1846 = vand.u32 %v1254, 4294901760
    %1847 = vmatpush1.msra.mxu0 %v1846
    %1848 = vmatprep.subr.mxu0 0.0
    %v1849 = vand.u32 %v1255, 4294901760
    %1850 = vmatpush1.msra.mxu0 %v1849
    %1851 = vmatprep.subr.mxu0 0.0
    %v1852 = vand.u32 %v1256, 4294901760
    %1853 = vmatpush1.msra.mxu0 %v1852
    %1854 = vmatprep.subr.mxu0 0.0
    %v1855 = vand.u32 %v1257, 4294901760
    %1856 = vmatpush1.msra.mxu0 %v1855
    %1857 = vmatprep.subr.mxu0 0.0
    %v1858 = vand.u32 %v1258, 4294901760
    %1859 = vmatpush1.msra.mxu0 %v1858
    %1860 = vmatprep.subr.mxu0 0.0
    %v1861 = vand.u32 %v1259, 4294901760
    %1862 = vmatpush1.msra.mxu0 %v1861
    %1863 = vmatprep.subr.mxu0 0.0
    %v1864 = vand.u32 %v1260, 4294901760
    %1865 = vmatpush1.msra.mxu0 %v1864
    %1866 = vmatprep.subr.mxu0 0.0
    %v1867 = vand.u32 %v1261, 4294901760
    %1868 = vmatpush1.msra.mxu0 %v1867
    %1869 = vmatprep.subr.mxu0 0.0
    %v1870 = vand.u32 %v1262, 4294901760
    %1871 = vmatpush1.msra.mxu0 %v1870
    %1872 = vmatprep.subr.mxu0 0.0
    %1873 = vmatpush1.msra.mxu0 0.0
    %1874 = vmatprep.subr.mxu0 0.0
    %1875 = vmatpush1.msra.mxu0 0.0
    %1876 = vmatprep.subr.mxu0 0.0
    %1877 = vmatpush1.msra.mxu0 0.0
    %1878 = vmatprep.subr.mxu0 0.0
    %1879 = vmatpush1.msra.mxu0 0.0
    %1880 = vmatprep.subr.mxu0 0.0
    %1881 = vmatpush1.msra.mxu0 0.0
    %1882 = vmatprep.subr.mxu0 0.0
    %1883 = vmatpush1.msra.mxu0 0.0
    %1884 = vmatprep.subr.mxu0 0.0
    %1885 = vmatpush1.msra.mxu0 0.0
    %1886 = vmatprep.subr.mxu0 0.0
    %1887 = vmatpush1.msra.mxu0 0.0
    %1888 = vmatprep.subr.mxu0 0.0
    %1889 = vmatpush1.msra.mxu0 0.0
    %1890 = vmatprep.subr.mxu0 0.0
    %1891 = vmatpush1.msra.mxu0 0.0
    %1892 = vmatprep.subr.mxu0 0.0
    %1893 = vmatpush1.msra.mxu0 0.0
    %1894 = vmatprep.subr.mxu0 0.0
    %1895 = vmatpush1.msra.mxu0 0.0
    %1896 = vmatprep.subr.mxu0 0.0
    %1897 = vmatpush1.msra.mxu0 0.0
    %1898 = vmatprep.subr.mxu0 0.0
    %1899 = vmatpush1.msra.mxu0 0.0
    %1900 = vmatprep.subr.mxu0 0.0
    %1901 = vmatpush1.msra.mxu0 0.0
    %1902 = vmatprep.subr.mxu0 0.0
    %1903 = vmatpush1.msra.mxu0 0.0
    %1904 = vmatprep.mubr.f32.mxu0 0.0
    %v1905 = vand.u32 %v1246, 4294901760
    %1906 = vmatmul.mubr.f32.gmra.mrb[0].mxu0 %v1905
    %v1907 = vpop.f32.mrb[0].mxu0
    %v1908 = vadd.f32 %v1821, %v1907
    %v1909 = vpop.f32.mrb[0].mxu0
    %1910 = vdwg.mxu0
    %1911 = vst [vmem:[#allocation10] sm:$0xff] %v1908
    // Predicated region
    $region46: #{ann_forward.1} parent=1 // pred_check
      _
    $region47: #{ann_forward.1} parent=1 // pred_check_branch
      %1913 = sbr.rel (0) target = $region49
    $region48: #{ann_forward.1} parent=1 // pred_region
      %s1915 = ssub.s32 128, 128
      %1916 = vsyncadd [#allocation4], %s1915
      %s1918 = sshll.u32 [#allocation10], 4
      %s1919 = int_to_ptr.vmem [resolvable:$true] %s1918
      %1921 = dma.vmem_to_hbm [thread:$0]  %s1919, 128, %s7, [#allocation4]
    $region49: #{ann_forward.1} parent=1 // pred_fallthru
      _
    // Predicated region
    $region50: #{ann_forward.1} parent=1 // pred_check
      _
    $region51: #{ann_forward.1} parent=1 // pred_check_branch
      %1923 = sbr.rel (0) target = $region53
    $region52: #{ann_forward.1} parent=1 // pred_region
      %1924 = dma.done [#allocation4], 128
    $region53: #{ann_forward.1} parent=1 // pred_fallthru
      _
    %1925 = vsyncpa [#allocation3], 1
    %1926 = vsyncpa [#allocation6], 1
    %1927 = vsyncpa [#allocation9], 1
    %1928 = vsyncpa [#allocation4], 1

</llo_original>
